<compile_context>
chip_gen: v5e
topology: v5e:2x2
jax: 0.10.0
libtpu: 0.0.40
codegen_flags: <defaults>
</compile_context>

<pallas_src>
import collections
import functools

import jax
import jax.numpy as jnp
import numpy as np
from jax.experimental import pallas as pl
from jax.experimental.pallas import tpu as pltpu


Geom = collections.namedtuple(
    "Geom",
    ["pad", "k_in",
     "ho1", "slab1", "step1", "row1",
     "ho2", "slab2", "step2", "row2",
     "h1_cols", "h2_cols"])


def _round_up(a, m):
    return (a + m - 1) // m * m


# ----------------------------------------------------------------------------
# Fused kernel: banded conv1 -> ReLU -> banded conv2 -> ReLU -> fc1 -> ReLU -> fc2
# Weights live in VMEM (constant index_maps); conv intermediates in VMEM scratch.
# ----------------------------------------------------------------------------
def _make_kernel(geom):
    def kernel(x_ref, w1_ref, b1_ref, w2_ref, b2_ref,
               w3_ref, b3_ref, w4_ref, b4_ref,
               o_ref, h1_ref, h2_ref):
        tm = x_ref.shape[0]
        bf16 = jnp.bfloat16

        # ---- conv1 + ReLU (row band): ho1 matmuls of (TM, slab1) x (slab1, row1)
        w1 = w1_ref[...]          # (slab1, row1) bf16
        b1 = b1_ref[...]          # (1, row1) f32
        # zero the H-padding rows of the staged conv1 output (conv2 reads them)
        pr = geom.pad * geom.row1
        zrow = jnp.zeros((tm, pr), jnp.float32)
        h1_ref[:, :pr] = zrow
        h1_ref[:, geom.h1_cols - pr:] = zrow
        for ho in range(geom.ho1):
            slab = x_ref[:, ho * geom.step1: ho * geom.step1 + geom.slab1].astype(bf16)
            y = jnp.dot(slab, w1, preferred_element_type=jnp.float32) + b1
            h1_ref[:, (ho + 1) * geom.row1: (ho + 2) * geom.row1] = jnp.maximum(y, 0.0)

        # ---- conv2 + ReLU (row band): ho2 matmuls of (TM, slab2) x (slab2, row2)
        w2 = w2_ref[...]
        b2 = b2_ref[...]
        for ho in range(geom.ho2):
            slab = h1_ref[:, ho * geom.step2: ho * geom.step2 + geom.slab2].astype(bf16)
            y = jnp.dot(slab, w2, preferred_element_type=jnp.float32) + b2
            h2_ref[:, ho * geom.row2: (ho + 1) * geom.row2] = jnp.maximum(y, 0.0)

        # ---- fc1 + ReLU, fc2 (head padded to 128 output lanes)
        h = h2_ref[...].astype(bf16)
        h = jnp.maximum(
            jnp.dot(h, w3_ref[...], preferred_element_type=jnp.float32) + b3_ref[...],
            0.0)
        out = (jnp.dot(h.astype(bf16), w4_ref[...], preferred_element_type=jnp.float32)
               + b4_ref[...])
        o_ref[...] = out.astype(o_ref.dtype)

    return kernel


def fused_forward(fp, x_nhwc, *, geom, n_classes=17):
    """fp: prepared (kernel-layout) params; x_nhwc: (B, H, W, C) f32."""
    B = x_nhwc.shape[0]
    p = geom.pad
    # Pad H by the conv padding (zero rows) and flatten NHWC; W padding is
    # folded into the band matrices.
    x_flat = jnp.pad(x_nhwc.astype(jnp.float32),
                     ((0, 0), (p, p), (0, 0), (0, 0))).reshape(B, -1)
    assert x_flat.shape[1] == geom.k_in

    # Batch (row) tiling: >= 2 grid steps when Mp >= 16 (both v7x TCs busy),
    # 128-row tiles for medium batch, 256-row tiles for Mp >= 512 (v6e/v7x MXU).
    Mp = _round_up(max(B, 8), 8)
    if Mp >= 512:
        TM = 256
    elif Mp >= 16:
        TM = min(128, _round_up(Mp // 2, 8))
    else:
        TM = Mp
    Mp = _round_up(Mp, TM)
    if Mp != B:
        x_flat = jnp.pad(x_flat, ((0, Mp - B), (0, 0)))

    N3 = fp["w3"].shape[1]
    N4 = fp["w4"].shape[1]

    flops = 2 * Mp * (geom.ho1 * geom.slab1 * geom.row1
                      + geom.ho2 * geom.slab2 * geom.row2
                      + geom.h2_cols * N3 + N3 * N4)
    bytes_accessed = (4 * Mp * geom.k_in + 4 * Mp * N4
                      + 2 * (fp["w1"].size + fp["w2"].size
                             + fp["w3"].size + fp["w4"].size)
                      + 4 * (fp["b1"].size + fp["b2"].size
                             + fp["b3"].size + fp["b4"].size))

    out = pl.pallas_call(
        _make_kernel(geom),
        out_shape=jax.ShapeDtypeStruct((Mp, N4), jnp.float32),
        grid=(Mp // TM,),
        in_specs=[
            pl.BlockSpec((TM, geom.k_in), lambda i: (i, 0)),    # x row tile
            pl.BlockSpec(fp["w1"].shape, lambda i: (0, 0)),     # conv1 row band
            pl.BlockSpec(fp["b1"].shape, lambda i: (0, 0)),
            pl.BlockSpec(fp["w2"].shape, lambda i: (0, 0)),     # conv2 row band
            pl.BlockSpec(fp["b2"].shape, lambda i: (0, 0)),
            pl.BlockSpec(fp["w3"].shape, lambda i: (0, 0)),     # fc1 (rows permuted)
            pl.BlockSpec(fp["b3"].shape, lambda i: (0, 0)),
            pl.BlockSpec(fp["w4"].shape, lambda i: (0, 0)),     # fc2 (17 -> 128 lanes)
            pl.BlockSpec(fp["b4"].shape, lambda i: (0, 0)),
        ],
        out_specs=pl.BlockSpec((TM, N4), lambda i: (i, 0)),
        scratch_shapes=[
            pltpu.VMEM((TM, geom.h1_cols), jnp.float32),   # conv1 out (H-padded)
            pltpu.VMEM((TM, geom.h2_cols), jnp.float32),   # conv2 out
        ],
        compiler_params=pltpu.CompilerParams(
            dimension_semantics=("parallel",),
            vmem_limit_bytes=32 * 1024 * 1024,
        ),
        cost_estimate=pl.CostEstimate(
            flops=flops, transcendentals=0, bytes_accessed=bytes_accessed),
    )(x_flat, fp["w1"], fp["b1"], fp["w2"], fp["b2"],
      fp["w3"], fp["b3"], fp["w4"], fp["b4"])

    return out[:B, :n_classes]


# ----------------------------------------------------------------------------
# One-time (init) parameter preparation: row-band conv matrices, bf16 weights,
# fc1 permutation, 128-lane head padding.
# ----------------------------------------------------------------------------
def _conv_row_band(w, b, W_in, stride, pad):
    """Row-band matrix for a KHxKW conv on NHWC data.

    Returns (band, bias_row):
      band     : (KH*W_in*C_in, Wo*C_out) — shared by every output row.
                 H padding is handled by zero input rows; W padding is baked
                 in as zero entries.
      bias_row : (1, Wo*C_out)
    """
    w = np.asarray(w, np.float32)
    b = np.asarray(b, np.float32)
    C_out, C_in, KH, KW = w.shape
    Wo = (W_in + 2 * pad - KW) // stride + 1
    band = np.zeros((KH * W_in * C_in, Wo * C_out), np.float32)
    for wo in range(Wo):
        for kh in range(KH):
            for kw in range(KW):
                wi = wo * stride - pad + kw
                if wi < 0 or wi >= W_in:
                    continue
                r = kh * W_in * C_in + wi * C_in
                band[r:r + C_in, wo * C_out:(wo + 1) * C_out] = w[:, :, kh, kw].T
    bias_row = np.tile(b[None, :], (Wo, 1)).reshape(1, -1)
    return band, bias_row


def prepare_fused_params(params, in_ch, in_dim, width, linear_size=128,
                         n_classes=17, lane_pad=128):
    c1, c2 = 4 * width, 8 * width
    d1, d2 = in_dim // 2, in_dim // 4
    KH = 4
    stride, pad = 2, 1

    w1_band, b1_row = _conv_row_band(params["w1"], params["b1"], in_dim, stride, pad)
    w2_band, b2_row = _conv_row_band(params["w2"], params["b2"], d1, stride, pad)

    # fc1 expects the PyTorch NCHW flatten (c, h, w); conv2 output here is
    # NHWC-flattened (h, w, c).  Fold the reordering into w3's rows, once.
    perm = np.empty(c2 * d2 * d2, np.int64)
    for h in range(d2):
        for w in range(d2):
            for c in range(c2):
                perm[(h * d2 + w) * c2 + c] = c * d2 * d2 + h * d2 + w
    w3_perm = np.asarray(params["w3"], np.float32).T[perm, :]
    b3 = np.asarray(params["b3"], np.float32)[None, :]

    n_pad = _round_up(n_classes, lane_pad)
    w4_pad = np.zeros((linear_size, n_pad), np.float32)
    w4_pad[:, :n_classes] = np.asarray(params["w4"], np.float32).T
    b4_pad = np.zeros((1, n_pad), np.float32)
    b4_pad[0, :n_classes] = np.asarray(params["b4"], np.float32)

    geom = Geom(
        pad=pad,
        k_in=(in_dim + 2 * pad) * in_dim * in_ch,
        ho1=d1, slab1=KH * in_dim * in_ch, step1=stride * in_dim * in_ch,
        row1=d1 * c1,
        ho2=d2, slab2=KH * d1 * c1, step2=stride * d1 * c1,
        row2=d2 * c2,
        h1_cols=(d1 + 2 * pad) * d1 * c1,
        h2_cols=d2 * d2 * c2,
    )

    fp = {
        "w1": jnp.asarray(w1_band, jnp.bfloat16), "b1": jnp.asarray(b1_row, jnp.float32),
        "w2": jnp.asarray(w2_band, jnp.bfloat16), "b2": jnp.asarray(b2_row, jnp.float32),
        "w3": jnp.asarray(w3_perm, jnp.bfloat16), "b3": jnp.asarray(b3, jnp.float32),
        "w4": jnp.asarray(w4_pad, jnp.bfloat16),  "b4": jnp.asarray(b4_pad, jnp.float32),
    }
    return fp, geom


# ----------------------------------------------------------------------------
# Raw (PyTorch-layout) parameter init + host-side numpy reference.
# ----------------------------------------------------------------------------
def init_params(key, in_ch, in_dim, width, linear_size=128, n_classes=17):
    c1, c2 = 4 * width, 8 * width
    flat = c2 * (in_dim // 4) * (in_dim // 4)
    ks = jax.random.split(key, 8)
    scale = 0.05
    return {
        "w1": scale * jax.random.normal(ks[0], (c1, in_ch, 4, 4), jnp.float32),
        "b1": scale * jax.random.normal(ks[1], (c1,), jnp.float32),
        "w2": scale * jax.random.normal(ks[2], (c2, c1, 4, 4), jnp.float32),
        "b2": scale * jax.random.normal(ks[3], (c2,), jnp.float32),
        "w3": scale * jax.random.normal(ks[4], (linear_size, flat), jnp.float32),
        "b3": scale * jax.random.normal(ks[5], (linear_size,), jnp.float32),
        "w4": scale * jax.random.normal(ks[6], (n_classes, linear_size), jnp.float32),
        "b4": scale * jax.random.normal(ks[7], (n_classes,), jnp.float32),
    }


def numpy_reference(params, x_nhwc):
    """Host reference replicating the PyTorch module (f32)."""
    x = np.asarray(x_nhwc, np.float32).transpose(0, 3, 1, 2)   # NCHW (permute)

    def conv(x, w, b, stride, pad):
        w = np.asarray(w, np.float32); b = np.asarray(b, np.float32)
        B, C, H, W = x.shape
        Co, Ci, KH, KW = w.shape
        Ho = (H + 2 * pad - KH) // stride + 1
        Wo = (W + 2 * pad - KW) // stride + 1
        xp = np.zeros((B, C, H + 2 * pad, W + 2 * pad), np.float32)
        xp[:, :, pad:pad + H, pad:pad + W] = x
        out = np.zeros((B, Co, Ho, Wo), np.float32)
        wm = w.reshape(Co, -1)
        for ho in range(Ho):
            for wo in range(Wo):
                patch = xp[:, :, ho * stride:ho * stride + KH, wo * stride:wo * stride + KW]
                out[:, :, ho, wo] = patch.reshape(B, -1) @ wm.T + b
        return out

    h = np.maximum(conv(x, params["w1"], params["b1"], 2, 1), 0.0)
    h = np.maximum(conv(h, params["w2"], params["b2"], 2, 1), 0.0)
    h = h.reshape(h.shape[0], -1)                                # NCHW flatten
    h = np.maximum(h @ np.asarray(params["w3"], np.float32).T
                   + np.asarray(params["b3"], np.float32), 0.0)
    return h @ np.asarray(params["w4"], np.float32).T + np.asarray(params["b4"], np.float32)


if __name__ == "__main__":
    # Small config: in_ch=4, in_dim=16, width=4, linear_size=128, 17 classes.
    in_ch, in_dim, width, linear_size = 4, 16, 4, 128
    n_classes = 17

    key = jax.random.PRNGKey(0)
    pkey, xkey, xkey2 = jax.random.split(key, 3)
    params = init_params(pkey, in_ch, in_dim, width, linear_size, n_classes)
    fp, geom = prepare_fused_params(params, in_ch, in_dim, width, linear_size, n_classes)

    fwd = jax.jit(functools.partial(fused_forward, geom=geom, n_classes=n_classes))

    # Two batch sizes: B=2 (single-tile path) and B=20 (multi-step parallel grid).
    for B, kk in ((2, xkey), (20, xkey2)):
        x = jax.random.normal(kk, (B, in_dim, in_dim, in_ch), jnp.float32)
        out = jax.block_until_ready(fwd(fp, x))
        assert out.shape == (B, n_classes), out.shape
        ref = numpy_reference(params, x)
        err = float(np.max(np.abs(np.asarray(out) - ref)))
        # bf16 MXU operands (f32 accumulation): tolerance loosened accordingly,
        # still far below the ~0.1 error a structural/permutation bug would give.
        if not np.allclose(np.asarray(out), ref, atol=2e-2, rtol=2e-2):
            raise AssertionError(f"B={B}: Pallas mismatch vs reference, max |diff| = {err}")

    print("KERNEL_OK")
</pallas_src>

<mosaic_0001>
module attributes {stable_mosaic.version = 11 : i64} {
  func.func @kernel(%arg0: i32, %arg1: memref<8x1152xf32, #tpu.memory_space<vmem>>, %arg2: memref<256x128xbf16, #tpu.memory_space<vmem>>, %arg3: memref<1x128xf32, #tpu.memory_space<vmem>>, %arg4: memref<512x128xbf16, #tpu.memory_space<vmem>>, %arg5: memref<1x128xf32, #tpu.memory_space<vmem>>, %arg6: memref<512x128xbf16, #tpu.memory_space<vmem>>, %arg7: memref<1x128xf32, #tpu.memory_space<vmem>>, %arg8: memref<128x128xbf16, #tpu.memory_space<vmem>>, %arg9: memref<1x128xf32, #tpu.memory_space<vmem>>, %arg10: memref<8x128xf32, #tpu.memory_space<vmem>>, %arg11: memref<8x1280xf32, #tpu.memory_space<vmem>>, %arg12: memref<8x512xf32, #tpu.memory_space<vmem>>) attributes {dimension_semantics = [#tpu.dimension_semantics<parallel>], iteration_bounds = array<i64: 1>, scalar_prefetch = 0 : i64, scratch_operands = 2 : i64, tpu.core_type = #tpu.core_type<tc>, window_params = [{transform_indices = @transform_0, window_bounds = array<i64: 8, 1152>}, {pipeline_mode = #tpu.pipeline_mode<synchronous>, transform_indices = @transform_1, window_bounds = array<i64: 256, 128>}, {pipeline_mode = #tpu.pipeline_mode<synchronous>, transform_indices = @transform_2, window_bounds = array<i64: 1, 128>}, {pipeline_mode = #tpu.pipeline_mode<synchronous>, transform_indices = @transform_3, window_bounds = array<i64: 512, 128>}, {pipeline_mode = #tpu.pipeline_mode<synchronous>, transform_indices = @transform_4, window_bounds = array<i64: 1, 128>}, {pipeline_mode = #tpu.pipeline_mode<synchronous>, transform_indices = @transform_5, window_bounds = array<i64: 512, 128>}, {pipeline_mode = #tpu.pipeline_mode<synchronous>, transform_indices = @transform_6, window_bounds = array<i64: 1, 128>}, {pipeline_mode = #tpu.pipeline_mode<synchronous>, transform_indices = @transform_7, window_bounds = array<i64: 128, 128>}, {pipeline_mode = #tpu.pipeline_mode<synchronous>, transform_indices = @transform_8, window_bounds = array<i64: 1, 128>}, {transform_indices = @transform_9, window_bounds = array<i64: 8, 128>}]} {
    %c0 = arith.constant 0 : index
    %c0_0 = arith.constant 0 : index
    %0 = vector.load %arg2[%c0, %c0_0] : memref<256x128xbf16, #tpu.memory_space<vmem>>, vector<256x128xbf16>
    %c0_1 = arith.constant 0 : index
    %c0_2 = arith.constant 0 : index
    %1 = vector.load %arg3[%c0_1, %c0_2] : memref<1x128xf32, #tpu.memory_space<vmem>>, vector<1x128xf32>
    %cst = arith.constant 0.000000e+00 : f32
    %2 = vector.broadcast %cst : f32 to vector<8x128xf32>
    %c0_3 = arith.constant 0 : index
    %c0_4 = arith.constant 0 : index
    %3 = vector.load %arg11[%c0_3, %c0_4] : memref<8x1280xf32, #tpu.memory_space<vmem>>, vector<8x128xf32>
    tpu.vector_store %arg11[%c0_3, %c0_4], %2 {strides = array<i32>} : memref<8x1280xf32, #tpu.memory_space<vmem>>, vector<8x128xf32>,
    %c0_5 = arith.constant 0 : index
    %c1152 = arith.constant 1152 : index
    %4 = vector.load %arg11[%c0_5, %c1152] : memref<8x1280xf32, #tpu.memory_space<vmem>>, vector<8x128xf32>
    tpu.vector_store %arg11[%c0_5, %c1152], %2 {strides = array<i32>} : memref<8x1280xf32, #tpu.memory_space<vmem>>, vector<8x128xf32>,
    %c0_6 = arith.constant 0 : index
    %c0_7 = arith.constant 0 : index
    %5 = vector.load %arg1[%c0_6, %c0_7] : memref<8x1152xf32, #tpu.memory_space<vmem>>, vector<8x256xf32>
    %6 = arith.truncf %5 : vector<8x256xf32> to vector<8x256xbf16>
    %cst_8 = arith.constant dense<0.000000e+00> : vector<8x128xf32>
    %7 = tpu.matmul %6, %0, %cst_8 {dimension_numbers = #tpu.dot_dimension_numbers<[1], [0], [0], [1], [0, 0, 1, 1], [], []>} : vector<8x256xbf16>, vector<256x128xbf16>, vector<8x128xf32> -> vector<8x128xf32>
    %8 = vector.broadcast %1 : vector<1x128xf32> to vector<8x128xf32>
    %9 = arith.addf %7, %8 : vector<8x128xf32>
    %cst_9 = arith.constant 0.000000e+00 : f32
    %10 = vector.broadcast %cst_9 : f32 to vector<8x128xf32>
    %11 = arith.maximumf %9, %10 : vector<8x128xf32>
    %c0_10 = arith.constant 0 : index
    %c128 = arith.constant 128 : index
    %12 = vector.load %arg11[%c0_10, %c128] : memref<8x1280xf32, #tpu.memory_space<vmem>>, vector<8x128xf32>
    tpu.vector_store %arg11[%c0_10, %c128], %11 {strides = array<i32>} : memref<8x1280xf32, #tpu.memory_space<vmem>>, vector<8x128xf32>,
    %c0_11 = arith.constant 0 : index
    %c128_12 = arith.constant 128 : index
    %13 = vector.load %arg1[%c0_11, %c128_12] : memref<8x1152xf32, #tpu.memory_space<vmem>>, vector<8x256xf32>
    %14 = arith.truncf %13 : vector<8x256xf32> to vector<8x256xbf16>
    %cst_13 = arith.constant dense<0.000000e+00> : vector<8x128xf32>
    %15 = tpu.matmul %14, %0, %cst_13 {dimension_numbers = #tpu.dot_dimension_numbers<[1], [0], [0], [1], [0, 0, 1, 1], [], []>} : vector<8x256xbf16>, vector<256x128xbf16>, vector<8x128xf32> -> vector<8x128xf32>
    %16 = vector.broadcast %1 : vector<1x128xf32> to vector<8x128xf32>
    %17 = arith.addf %15, %16 : vector<8x128xf32>
    %cst_14 = arith.constant 0.000000e+00 : f32
    %18 = vector.broadcast %cst_14 : f32 to vector<8x128xf32>
    %19 = arith.maximumf %17, %18 : vector<8x128xf32>
    %c0_15 = arith.constant 0 : index
    %c256 = arith.constant 256 : index
    %20 = vector.load %arg11[%c0_15, %c256] : memref<8x1280xf32, #tpu.memory_space<vmem>>, vector<8x128xf32>
    tpu.vector_store %arg11[%c0_15, %c256], %19 {strides = array<i32>} : memref<8x1280xf32, #tpu.memory_space<vmem>>, vector<8x128xf32>,
    %c0_16 = arith.constant 0 : index
    %c256_17 = arith.constant 256 : index
    %21 = vector.load %arg1[%c0_16, %c256_17] : memref<8x1152xf32, #tpu.memory_space<vmem>>, vector<8x256xf32>
    %22 = arith.truncf %21 : vector<8x256xf32> to vector<8x256xbf16>
    %cst_18 = arith.constant dense<0.000000e+00> : vector<8x128xf32>
    %23 = tpu.matmul %22, %0, %cst_18 {dimension_numbers = #tpu.dot_dimension_numbers<[1], [0], [0], [1], [0, 0, 1, 1], [], []>} : vector<8x256xbf16>, vector<256x128xbf16>, vector<8x128xf32> -> vector<8x128xf32>
    %24 = vector.broadcast %1 : vector<1x128xf32> to vector<8x128xf32>
    %25 = arith.addf %23, %24 : vector<8x128xf32>
    %cst_19 = arith.constant 0.000000e+00 : f32
    %26 = vector.broadcast %cst_19 : f32 to vector<8x128xf32>
    %27 = arith.maximumf %25, %26 : vector<8x128xf32>
    %c0_20 = arith.constant 0 : index
    %c384 = arith.constant 384 : index
    %28 = vector.load %arg11[%c0_20, %c384] : memref<8x1280xf32, #tpu.memory_space<vmem>>, vector<8x128xf32>
    tpu.vector_store %arg11[%c0_20, %c384], %27 {strides = array<i32>} : memref<8x1280xf32, #tpu.memory_space<vmem>>, vector<8x128xf32>,
    %c0_21 = arith.constant 0 : index
    %c384_22 = arith.constant 384 : index
    %29 = vector.load %arg1[%c0_21, %c384_22] : memref<8x1152xf32, #tpu.memory_space<vmem>>, vector<8x256xf32>
    %30 = arith.truncf %29 : vector<8x256xf32> to vector<8x256xbf16>
    %cst_23 = arith.constant dense<0.000000e+00> : vector<8x128xf32>
    %31 = tpu.matmul %30, %0, %cst_23 {dimension_numbers = #tpu.dot_dimension_numbers<[1], [0], [0], [1], [0, 0, 1, 1], [], []>} : vector<8x256xbf16>, vector<256x128xbf16>, vector<8x128xf32> -> vector<8x128xf32>
    %32 = vector.broadcast %1 : vector<1x128xf32> to vector<8x128xf32>
    %33 = arith.addf %31, %32 : vector<8x128xf32>
    %cst_24 = arith.constant 0.000000e+00 : f32
    %34 = vector.broadcast %cst_24 : f32 to vector<8x128xf32>
    %35 = arith.maximumf %33, %34 : vector<8x128xf32>
    %c0_25 = arith.constant 0 : index
    %c512 = arith.constant 512 : index
    %36 = vector.load %arg11[%c0_25, %c512] : memref<8x1280xf32, #tpu.memory_space<vmem>>, vector<8x128xf32>
    tpu.vector_store %arg11[%c0_25, %c512], %35 {strides = array<i32>} : memref<8x1280xf32, #tpu.memory_space<vmem>>, vector<8x128xf32>,
    %c0_26 = arith.constant 0 : index
    %c512_27 = arith.constant 512 : index
    %37 = vector.load %arg1[%c0_26, %c512_27] : memref<8x1152xf32, #tpu.memory_space<vmem>>, vector<8x256xf32>
    %38 = arith.truncf %37 : vector<8x256xf32> to vector<8x256xbf16>
    %cst_28 = arith.constant dense<0.000000e+00> : vector<8x128xf32>
    %39 = tpu.matmul %38, %0, %cst_28 {dimension_numbers = #tpu.dot_dimension_numbers<[1], [0], [0], [1], [0, 0, 1, 1], [], []>} : vector<8x256xbf16>, vector<256x128xbf16>, vector<8x128xf32> -> vector<8x128xf32>
    %40 = vector.broadcast %1 : vector<1x128xf32> to vector<8x128xf32>
    %41 = arith.addf %39, %40 : vector<8x128xf32>
    %cst_29 = arith.constant 0.000000e+00 : f32
    %42 = vector.broadcast %cst_29 : f32 to vector<8x128xf32>
    %43 = arith.maximumf %41, %42 : vector<8x128xf32>
    %c0_30 = arith.constant 0 : index
    %c640 = arith.constant 640 : index
    %44 = vector.load %arg11[%c0_30, %c640] : memref<8x1280xf32, #tpu.memory_space<vmem>>, vector<8x128xf32>
    tpu.vector_store %arg11[%c0_30, %c640], %43 {strides = array<i32>} : memref<8x1280xf32, #tpu.memory_space<vmem>>, vector<8x128xf32>,
    %c0_31 = arith.constant 0 : index
    %c640_32 = arith.constant 640 : index
    %45 = vector.load %arg1[%c0_31, %c640_32] : memref<8x1152xf32, #tpu.memory_space<vmem>>, vector<8x256xf32>
    %46 = arith.truncf %45 : vector<8x256xf32> to vector<8x256xbf16>
    %cst_33 = arith.constant dense<0.000000e+00> : vector<8x128xf32>
    %47 = tpu.matmul %46, %0, %cst_33 {dimension_numbers = #tpu.dot_dimension_numbers<[1], [0], [0], [1], [0, 0, 1, 1], [], []>} : vector<8x256xbf16>, vector<256x128xbf16>, vector<8x128xf32> -> vector<8x128xf32>
    %48 = vector.broadcast %1 : vector<1x128xf32> to vector<8x128xf32>
    %49 = arith.addf %47, %48 : vector<8x128xf32>
    %cst_34 = arith.constant 0.000000e+00 : f32
    %50 = vector.broadcast %cst_34 : f32 to vector<8x128xf32>
    %51 = arith.maximumf %49, %50 : vector<8x128xf32>
    %c0_35 = arith.constant 0 : index
    %c768 = arith.constant 768 : index
    %52 = vector.load %arg11[%c0_35, %c768] : memref<8x1280xf32, #tpu.memory_space<vmem>>, vector<8x128xf32>
    tpu.vector_store %arg11[%c0_35, %c768], %51 {strides = array<i32>} : memref<8x1280xf32, #tpu.memory_space<vmem>>, vector<8x128xf32>,
    %c0_36 = arith.constant 0 : index
    %c768_37 = arith.constant 768 : index
    %53 = vector.load %arg1[%c0_36, %c768_37] : memref<8x1152xf32, #tpu.memory_space<vmem>>, vector<8x256xf32>
    %54 = arith.truncf %53 : vector<8x256xf32> to vector<8x256xbf16>
    %cst_38 = arith.constant dense<0.000000e+00> : vector<8x128xf32>
    %55 = tpu.matmul %54, %0, %cst_38 {dimension_numbers = #tpu.dot_dimension_numbers<[1], [0], [0], [1], [0, 0, 1, 1], [], []>} : vector<8x256xbf16>, vector<256x128xbf16>, vector<8x128xf32> -> vector<8x128xf32>
    %56 = vector.broadcast %1 : vector<1x128xf32> to vector<8x128xf32>
    %57 = arith.addf %55, %56 : vector<8x128xf32>
    %cst_39 = arith.constant 0.000000e+00 : f32
    %58 = vector.broadcast %cst_39 : f32 to vector<8x128xf32>
    %59 = arith.maximumf %57, %58 : vector<8x128xf32>
    %c0_40 = arith.constant 0 : index
    %c896 = arith.constant 896 : index
    %60 = vector.load %arg11[%c0_40, %c896] : memref<8x1280xf32, #tpu.memory_space<vmem>>, vector<8x128xf32>
    tpu.vector_store %arg11[%c0_40, %c896], %59 {strides = array<i32>} : memref<8x1280xf32, #tpu.memory_space<vmem>>, vector<8x128xf32>,
    %c0_41 = arith.constant 0 : index
    %c896_42 = arith.constant 896 : index
    %61 = vector.load %arg1[%c0_41, %c896_42] : memref<8x1152xf32, #tpu.memory_space<vmem>>, vector<8x256xf32>
    %62 = arith.truncf %61 : vector<8x256xf32> to vector<8x256xbf16>
    %cst_43 = arith.constant dense<0.000000e+00> : vector<8x128xf32>
    %63 = tpu.matmul %62, %0, %cst_43 {dimension_numbers = #tpu.dot_dimension_numbers<[1], [0], [0], [1], [0, 0, 1, 1], [], []>} : vector<8x256xbf16>, vector<256x128xbf16>, vector<8x128xf32> -> vector<8x128xf32>
    %64 = vector.broadcast %1 : vector<1x128xf32> to vector<8x128xf32>
    %65 = arith.addf %63, %64 : vector<8x128xf32>
    %cst_44 = arith.constant 0.000000e+00 : f32
    %66 = vector.broadcast %cst_44 : f32 to vector<8x128xf32>
    %67 = arith.maximumf %65, %66 : vector<8x128xf32>
    %c0_45 = arith.constant 0 : index
    %c1024 = arith.constant 1024 : index
    %68 = vector.load %arg11[%c0_45, %c1024] : memref<8x1280xf32, #tpu.memory_space<vmem>>, vector<8x128xf32>
    tpu.vector_store %arg11[%c0_45, %c1024], %67 {strides = array<i32>} : memref<8x1280xf32, #tpu.memory_space<vmem>>, vector<8x128xf32>,
    %c0_46 = arith.constant 0 : index
    %c0_47 = arith.constant 0 : index
    %69 = vector.load %arg4[%c0_46, %c0_47] : memref<512x128xbf16, #tpu.memory_space<vmem>>, vector<512x128xbf16>
    %c0_48 = arith.constant 0 : index
    %c0_49 = arith.constant 0 : index
    %70 = vector.load %arg5[%c0_48, %c0_49] : memref<1x128xf32, #tpu.memory_space<vmem>>, vector<1x128xf32>
    %c0_50 = arith.constant 0 : index
    %c0_51 = arith.constant 0 : index
    %71 = vector.load %arg11[%c0_50, %c0_51] : memref<8x1280xf32, #tpu.memory_space<vmem>>, vector<8x512xf32>
    %72 = arith.truncf %71 : vector<8x512xf32> to vector<8x512xbf16>
    %cst_52 = arith.constant dense<0.000000e+00> : vector<8x128xf32>
    %73 = tpu.matmul %72, %69, %cst_52 {dimension_numbers = #tpu.dot_dimension_numbers<[1], [0], [0], [1], [0, 0, 1, 1], [], []>} : vector<8x512xbf16>, vector<512x128xbf16>, vector<8x128xf32> -> vector<8x128xf32>
    %74 = vector.broadcast %70 : vector<1x128xf32> to vector<8x128xf32>
    %75 = arith.addf %73, %74 : vector<8x128xf32>
    %cst_53 = arith.constant 0.000000e+00 : f32
    %76 = vector.broadcast %cst_53 : f32 to vector<8x128xf32>
    %77 = arith.maximumf %75, %76 : vector<8x128xf32>
    %c0_54 = arith.constant 0 : index
    %c0_55 = arith.constant 0 : index
    %78 = vector.load %arg12[%c0_54, %c0_55] : memref<8x512xf32, #tpu.memory_space<vmem>>, vector<8x128xf32>
    tpu.vector_store %arg12[%c0_54, %c0_55], %77 {strides = array<i32>} : memref<8x512xf32, #tpu.memory_space<vmem>>, vector<8x128xf32>,
    %c0_56 = arith.constant 0 : index
    %c256_57 = arith.constant 256 : index
    %79 = vector.load %arg11[%c0_56, %c256_57] : memref<8x1280xf32, #tpu.memory_space<vmem>>, vector<8x512xf32>
    %80 = arith.truncf %79 : vector<8x512xf32> to vector<8x512xbf16>
    %cst_58 = arith.constant dense<0.000000e+00> : vector<8x128xf32>
    %81 = tpu.matmul %80, %69, %cst_58 {dimension_numbers = #tpu.dot_dimension_numbers<[1], [0], [0], [1], [0, 0, 1, 1], [], []>} : vector<8x512xbf16>, vector<512x128xbf16>, vector<8x128xf32> -> vector<8x128xf32>
    %82 = vector.broadcast %70 : vector<1x128xf32> to vector<8x128xf32>
    %83 = arith.addf %81, %82 : vector<8x128xf32>
    %cst_59 = arith.constant 0.000000e+00 : f32
    %84 = vector.broadcast %cst_59 : f32 to vector<8x128xf32>
    %85 = arith.maximumf %83, %84 : vector<8x128xf32>
    %c0_60 = arith.constant 0 : index
    %c128_61 = arith.constant 128 : index
    %86 = vector.load %arg12[%c0_60, %c128_61] : memref<8x512xf32, #tpu.memory_space<vmem>>, vector<8x128xf32>
    tpu.vector_store %arg12[%c0_60, %c128_61], %85 {strides = array<i32>} : memref<8x512xf32, #tpu.memory_space<vmem>>, vector<8x128xf32>,
    %c0_62 = arith.constant 0 : index
    %c512_63 = arith.constant 512 : index
    %87 = vector.load %arg11[%c0_62, %c512_63] : memref<8x1280xf32, #tpu.memory_space<vmem>>, vector<8x512xf32>
    %88 = arith.truncf %87 : vector<8x512xf32> to vector<8x512xbf16>
    %cst_64 = arith.constant dense<0.000000e+00> : vector<8x128xf32>
    %89 = tpu.matmul %88, %69, %cst_64 {dimension_numbers = #tpu.dot_dimension_numbers<[1], [0], [0], [1], [0, 0, 1, 1], [], []>} : vector<8x512xbf16>, vector<512x128xbf16>, vector<8x128xf32> -> vector<8x128xf32>
    %90 = vector.broadcast %70 : vector<1x128xf32> to vector<8x128xf32>
    %91 = arith.addf %89, %90 : vector<8x128xf32>
    %cst_65 = arith.constant 0.000000e+00 : f32
    %92 = vector.broadcast %cst_65 : f32 to vector<8x128xf32>
    %93 = arith.maximumf %91, %92 : vector<8x128xf32>
    %c0_66 = arith.constant 0 : index
    %c256_67 = arith.constant 256 : index
    %94 = vector.load %arg12[%c0_66, %c256_67] : memref<8x512xf32, #tpu.memory_space<vmem>>, vector<8x128xf32>
    tpu.vector_store %arg12[%c0_66, %c256_67], %93 {strides = array<i32>} : memref<8x512xf32, #tpu.memory_space<vmem>>, vector<8x128xf32>,
    %c0_68 = arith.constant 0 : index
    %c768_69 = arith.constant 768 : index
    %95 = vector.load %arg11[%c0_68, %c768_69] : memref<8x1280xf32, #tpu.memory_space<vmem>>, vector<8x512xf32>
    %96 = arith.truncf %95 : vector<8x512xf32> to vector<8x512xbf16>
    %cst_70 = arith.constant dense<0.000000e+00> : vector<8x128xf32>
    %97 = tpu.matmul %96, %69, %cst_70 {dimension_numbers = #tpu.dot_dimension_numbers<[1], [0], [0], [1], [0, 0, 1, 1], [], []>} : vector<8x512xbf16>, vector<512x128xbf16>, vector<8x128xf32> -> vector<8x128xf32>
    %98 = vector.broadcast %70 : vector<1x128xf32> to vector<8x128xf32>
    %99 = arith.addf %97, %98 : vector<8x128xf32>
    %cst_71 = arith.constant 0.000000e+00 : f32
    %100 = vector.broadcast %cst_71 : f32 to vector<8x128xf32>
    %101 = arith.maximumf %99, %100 : vector<8x128xf32>
    %c0_72 = arith.constant 0 : index
    %c384_73 = arith.constant 384 : index
    %102 = vector.load %arg12[%c0_72, %c384_73] : memref<8x512xf32, #tpu.memory_space<vmem>>, vector<8x128xf32>
    tpu.vector_store %arg12[%c0_72, %c384_73], %101 {strides = array<i32>} : memref<8x512xf32, #tpu.memory_space<vmem>>, vector<8x128xf32>,
    %c0_74 = arith.constant 0 : index
    %c0_75 = arith.constant 0 : index
    %103 = vector.load %arg12[%c0_74, %c0_75] : memref<8x512xf32, #tpu.memory_space<vmem>>, vector<8x512xf32>
    %104 = arith.truncf %103 : vector<8x512xf32> to vector<8x512xbf16>
    %c0_76 = arith.constant 0 : index
    %c0_77 = arith.constant 0 : index
    %105 = vector.load %arg6[%c0_76, %c0_77] : memref<512x128xbf16, #tpu.memory_space<vmem>>, vector<512x128xbf16>
    %cst_78 = arith.constant dense<0.000000e+00> : vector<8x128xf32>
    %106 = tpu.matmul %104, %105, %cst_78 {dimension_numbers = #tpu.dot_dimension_numbers<[1], [0], [0], [1], [0, 0, 1, 1], [], []>} : vector<8x512xbf16>, vector<512x128xbf16>, vector<8x128xf32> -> vector<8x128xf32>
    %c0_79 = arith.constant 0 : index
    %c0_80 = arith.constant 0 : index
    %107 = vector.load %arg7[%c0_79, %c0_80] : memref<1x128xf32, #tpu.memory_space<vmem>>, vector<1x128xf32>
    %108 = vector.broadcast %107 : vector<1x128xf32> to vector<8x128xf32>
    %109 = arith.addf %106, %108 : vector<8x128xf32>
    %cst_81 = arith.constant 0.000000e+00 : f32
    %110 = vector.broadcast %cst_81 : f32 to vector<8x128xf32>
    %111 = arith.maximumf %109, %110 : vector<8x128xf32>
    %112 = arith.truncf %111 : vector<8x128xf32> to vector<8x128xbf16>
    %c0_82 = arith.constant 0 : index
    %c0_83 = arith.constant 0 : index
    %113 = vector.load %arg8[%c0_82, %c0_83] : memref<128x128xbf16, #tpu.memory_space<vmem>>, vector<128x128xbf16>
    %cst_84 = arith.constant dense<0.000000e+00> : vector<8x128xf32>
    %114 = tpu.matmul %112, %113, %cst_84 {dimension_numbers = #tpu.dot_dimension_numbers<[1], [0], [0], [1], [0, 0, 1, 1], [], []>} : vector<8x128xbf16>, vector<128x128xbf16>, vector<8x128xf32> -> vector<8x128xf32>
    %c0_85 = arith.constant 0 : index
    %c0_86 = arith.constant 0 : index
    %115 = vector.load %arg9[%c0_85, %c0_86] : memref<1x128xf32, #tpu.memory_space<vmem>>, vector<1x128xf32>
    %116 = vector.broadcast %115 : vector<1x128xf32> to vector<8x128xf32>
    %117 = arith.addf %114, %116 : vector<8x128xf32>
    %c0_87 = arith.constant 0 : index
    %c0_88 = arith.constant 0 : index
    %118 = vector.load %arg10[%c0_87, %c0_88] : memref<8x128xf32, #tpu.memory_space<vmem>>, vector<8x128xf32>
    tpu.vector_store %arg10[%c0_87, %c0_88], %117 {strides = array<i32>} : memref<8x128xf32, #tpu.memory_space<vmem>>, vector<8x128xf32>,
    return
  }
  func.func @transform_0(%arg0: i32) -> (i32, i32) {
    %c0_i32 = arith.constant 0 : i32
    %c0_i32_0 = arith.constant 0 : i32
    return %arg0, %c0_i32 : i32, i32
  }
  func.func @transform_1(%arg0: i32) -> (i32, i32) {
    %c0_i32 = arith.constant 0 : i32
    %c0_i32_0 = arith.constant 0 : i32
    %c0_i32_1 = arith.constant 0 : i32
    return %c0_i32, %c0_i32_0 : i32, i32
  }
  func.func @transform_2(%arg0: i32) -> (i32, i32) {
    %c0_i32 = arith.constant 0 : i32
    %c0_i32_0 = arith.constant 0 : i32
    %c0_i32_1 = arith.constant 0 : i32
    return %c0_i32, %c0_i32_0 : i32, i32
  }
  func.func @transform_3(%arg0: i32) -> (i32, i32) {
    %c0_i32 = arith.constant 0 : i32
    %c0_i32_0 = arith.constant 0 : i32
    %c0_i32_1 = arith.constant 0 : i32
    return %c0_i32, %c0_i32_0 : i32, i32
  }
  func.func @transform_4(%arg0: i32) -> (i32, i32) {
    %c0_i32 = arith.constant 0 : i32
    %c0_i32_0 = arith.constant 0 : i32
    %c0_i32_1 = arith.constant 0 : i32
    return %c0_i32, %c0_i32_0 : i32, i32
  }
  func.func @transform_5(%arg0: i32) -> (i32, i32) {
    %c0_i32 = arith.constant 0 : i32
    %c0_i32_0 = arith.constant 0 : i32
    %c0_i32_1 = arith.constant 0 : i32
    return %c0_i32, %c0_i32_0 : i32, i32
  }
  func.func @transform_6(%arg0: i32) -> (i32, i32) {
    %c0_i32 = arith.constant 0 : i32
    %c0_i32_0 = arith.constant 0 : i32
    %c0_i32_1 = arith.constant 0 : i32
    return %c0_i32, %c0_i32_0 : i32, i32
  }
  func.func @transform_7(%arg0: i32) -> (i32, i32) {
    %c0_i32 = arith.constant 0 : i32
    %c0_i32_0 = arith.constant 0 : i32
    %c0_i32_1 = arith.constant 0 : i32
    return %c0_i32, %c0_i32_0 : i32, i32
  }
  func.func @transform_8(%arg0: i32) -> (i32, i32) {
    %c0_i32 = arith.constant 0 : i32
    %c0_i32_0 = arith.constant 0 : i32
    %c0_i32_1 = arith.constant 0 : i32
    return %c0_i32, %c0_i32_0 : i32, i32
  }
  func.func @transform_9(%arg0: i32) -> (i32, i32) {
    %c0_i32 = arith.constant 0 : i32
    %c0_i32_0 = arith.constant 0 : i32
    return %arg0, %c0_i32 : i32, i32
  }
}

</mosaic_0001>

<llo_original>
// kernel: fused_forward.1
$region0: #{fused_forward.1}
  #allocation0 [shape = 'u32[]', space=smem, size = 0x4, offset = 0x4, fixed_abs, tag = 'smem constant byte address 0x4 - core index']
  #allocation1 [shape = 'u32[72,128]{1,0:T(1,128)}', space=vmem, size = 0x9000, scoped, tag = 'internal scratch']
  #allocation2 [shape = 'f32[8,1280]{1,0:T(8,128)}', space=vmem, size = 0xa000, scoped, tag = 'scratch operand']
  #allocation3 [shape = 'f32[8,512]{1,0:T(8,128)}', space=vmem, size = 0x4000, scoped, tag = 'scratch operand']
  %s0 = inlined_call_operand.vmem [shape: f32[8,1152], index: 0, kind: input, shape index: {}]
  %s1 = inlined_call_operand.vmem [shape: bf16[256,128], index: 1, kind: input, shape index: {}]
  %s2 = inlined_call_operand.vmem [shape: f32[1,128], index: 2, kind: input, shape index: {}]
  %s3 = inlined_call_operand.vmem [shape: bf16[512,128], index: 3, kind: input, shape index: {}]
  %s4 = inlined_call_operand.vmem [shape: f32[1,128], index: 4, kind: input, shape index: {}]
  %s5 = inlined_call_operand.vmem [shape: bf16[512,128], index: 5, kind: input, shape index: {}]
  %s6 = inlined_call_operand.vmem [shape: f32[1,128], index: 6, kind: input, shape index: {}]
  %s7 = inlined_call_operand.vmem [shape: bf16[128,128], index: 7, kind: input, shape index: {}]
  %s8 = inlined_call_operand.vmem [shape: f32[1,128], index: 8, kind: input, shape index: {}]
  %s9 = inlined_call_operand.vmem [shape: f32[8,128], index: 9, kind: output, shape index: {}]
  %s10 = sld [smem:[#allocation0]]
  $region46: #{fused_forward.1} parent=0
    _
  %s12 = ssub.s32 1, %s10
  %s13 = scalar_select 0, %s12, %s10
  // Predicated region
  $region2: #{fused_forward.1} parent=0 // pred_check
    _
  $region3: #{fused_forward.1} parent=0 // pred_check_branch
    %15 = sbr.rel (0) target = $region5
  $region4: #{fused_forward.1} parent=0 // pred_region
    _
  $region5: #{fused_forward.1} parent=0 // pred_fallthru
    _
  // Predicated region
  $region6: #{fused_forward.1} parent=0 // pred_check
    _
  $region7: #{fused_forward.1} parent=0 // pred_check_branch
    %17 = sbr.rel (0) target = $region9
  $region8: #{fused_forward.1} parent=0 // pred_region
    _
  $region9: #{fused_forward.1} parent=0 // pred_fallthru
    _
  // Predicated region
  $region10: #{fused_forward.1} parent=0 // pred_check
    _
  $region11: #{fused_forward.1} parent=0 // pred_check_branch
    %19 = sbr.rel (0) target = $region13
  $region12: #{fused_forward.1} parent=0 // pred_region
    _
  $region13: #{fused_forward.1} parent=0 // pred_fallthru
    _
  // Predicated region
  $region14: #{fused_forward.1} parent=0 // pred_check
    _
  $region15: #{fused_forward.1} parent=0 // pred_check_branch
    %21 = sbr.rel (0) target = $region17
  $region16: #{fused_forward.1} parent=0 // pred_region
    _
  $region17: #{fused_forward.1} parent=0 // pred_fallthru
    _
  // Predicated region
  $region18: #{fused_forward.1} parent=0 // pred_check
    _
  $region19: #{fused_forward.1} parent=0 // pred_check_branch
    %23 = sbr.rel (0) target = $region21
  $region20: #{fused_forward.1} parent=0 // pred_region
    _
  $region21: #{fused_forward.1} parent=0 // pred_fallthru
    _
  // Predicated region
  $region22: #{fused_forward.1} parent=0 // pred_check
    _
  $region23: #{fused_forward.1} parent=0 // pred_check_branch
    %25 = sbr.rel (0) target = $region25
  $region24: #{fused_forward.1} parent=0 // pred_region
    _
  $region25: #{fused_forward.1} parent=0 // pred_fallthru
    _
  // Predicated region
  $region26: #{fused_forward.1} parent=0 // pred_check
    _
  $region27: #{fused_forward.1} parent=0 // pred_check_branch
    %27 = sbr.rel (0) target = $region29
  $region28: #{fused_forward.1} parent=0 // pred_region
    _
  $region29: #{fused_forward.1} parent=0 // pred_fallthru
    _
  // Predicated region
  $region30: #{fused_forward.1} parent=0 // pred_check
    _
  $region31: #{fused_forward.1} parent=0 // pred_check_branch
    %29 = sbr.rel (0) target = $region33
  $region32: #{fused_forward.1} parent=0 // pred_region
    _
  $region33: #{fused_forward.1} parent=0 // pred_fallthru
    _
  // Predicated region
  $region34: #{fused_forward.1} parent=0 // pred_check
    _
  $region35: #{fused_forward.1} parent=0 // pred_check_branch
    %31 = sbr.rel (0) target = $region37
  $region36: #{fused_forward.1} parent=0 // pred_region
    _
  $region37: #{fused_forward.1} parent=0 // pred_fallthru
    _
  %v32 = vld [vmem:[%s1] sm:$0xf]
  %v33 = vld [vmem:[%s1 + $0x4] sm:$0xf]
  %v34 = vld [vmem:[%s1 + $0x8] sm:$0xf]
  %v35 = vld [vmem:[%s1 + $0xc] sm:$0xf]
  %v36 = vld [vmem:[%s1 + $0x10] sm:$0xf]
  %v37 = vld [vmem:[%s1 + $0x14] sm:$0xf]
  %v38 = vld [vmem:[%s1 + $0x18] sm:$0xf]
  %v39 = vld [vmem:[%s1 + $0x1c] sm:$0xf]
  %v40 = vld [vmem:[%s1 + $0x20] sm:$0xf]
  %v41 = vld [vmem:[%s1 + $0x24] sm:$0xf]
  %v42 = vld [vmem:[%s1 + $0x28] sm:$0xf]
  %v43 = vld [vmem:[%s1 + $0x2c] sm:$0xf]
  %v44 = vld [vmem:[%s1 + $0x30] sm:$0xf]
  %v45 = vld [vmem:[%s1 + $0x34] sm:$0xf]
  %v46 = vld [vmem:[%s1 + $0x38] sm:$0xf]
  %v47 = vld [vmem:[%s1 + $0x3c] sm:$0xf]
  %v48 = vld [vmem:[%s1 + $0x40] sm:$0xf]
  %v49 = vld [vmem:[%s1 + $0x44] sm:$0xf]
  %v50 = vld [vmem:[%s1 + $0x48] sm:$0xf]
  %v51 = vld [vmem:[%s1 + $0x4c] sm:$0xf]
  %v52 = vld [vmem:[%s1 + $0x50] sm:$0xf]
  %v53 = vld [vmem:[%s1 + $0x54] sm:$0xf]
  %v54 = vld [vmem:[%s1 + $0x58] sm:$0xf]
  %v55 = vld [vmem:[%s1 + $0x5c] sm:$0xf]
  %v56 = vld [vmem:[%s1 + $0x60] sm:$0xf]
  %v57 = vld [vmem:[%s1 + $0x64] sm:$0xf]
  %v58 = vld [vmem:[%s1 + $0x68] sm:$0xf]
  %v59 = vld [vmem:[%s1 + $0x6c] sm:$0xf]
  %v60 = vld [vmem:[%s1 + $0x70] sm:$0xf]
  %v61 = vld [vmem:[%s1 + $0x74] sm:$0xf]
  %v62 = vld [vmem:[%s1 + $0x78] sm:$0xf]
  %v63 = vld [vmem:[%s1 + $0x7c] sm:$0xf]
  %v64 = vld [vmem:[%s2] sm:$0x1]
  %65 = vst [vmem:[#allocation2] sm:$0xff] 0.0
  %66 = vst [vmem:[#allocation2 + $0x48] sm:$0xff] 0.0
  %v67 = vld [vmem:[%s0] sm:$0xff]
  %v68 = vld [vmem:[%s0 + $0x8] sm:$0xff]
  %v69 = vpack.c.bf16 %v67, %v67
  %v70 = vpack.c.bf16 %v68, %v68
  %v72 = vperm.slane %v64, 0
  %v106 = vunpack.c.l.b16 %v32
  %v107 = vunpack.c.l.b16 %v33
  %v108 = vunpack.c.l.b16 %v34
  %v109 = vunpack.c.l.b16 %v35
  %v110 = vunpack.c.l.b16 %v36
  %v111 = vunpack.c.l.b16 %v37
  %v112 = vunpack.c.l.b16 %v38
  %v113 = vunpack.c.l.b16 %v39
  %v114 = vunpack.c.l.b16 %v40
  %v115 = vunpack.c.l.b16 %v41
  %v116 = vunpack.c.l.b16 %v42
  %v117 = vunpack.c.l.b16 %v43
  %v118 = vunpack.c.l.b16 %v44
  %v119 = vunpack.c.l.b16 %v45
  %v120 = vunpack.c.l.b16 %v46
  %v121 = vunpack.c.l.b16 %v47
  %v122 = vunpack.c.l.b16 %v48
  %v123 = vunpack.c.l.b16 %v49
  %v124 = vunpack.c.l.b16 %v50
  %v125 = vunpack.c.l.b16 %v51
  %v126 = vunpack.c.l.b16 %v52
  %v127 = vunpack.c.l.b16 %v53
  %v128 = vunpack.c.l.b16 %v54
  %v129 = vunpack.c.l.b16 %v55
  %v130 = vunpack.c.l.b16 %v56
  %v131 = vunpack.c.l.b16 %v57
  %v132 = vunpack.c.l.b16 %v58
  %v133 = vunpack.c.l.b16 %v59
  %v134 = vunpack.c.l.b16 %v60
  %v135 = vunpack.c.l.b16 %v61
  %v136 = vunpack.c.l.b16 %v62
  %v137 = vunpack.c.l.b16 %v63
  %v138 = vpack.c.b16 %v107, %v106
  %v139 = vpack.c.b16 %v109, %v108
  %v140 = vpack.c.b16 %v111, %v110
  %v141 = vpack.c.b16 %v113, %v112
  %v142 = vpack.c.b16 %v115, %v114
  %v143 = vpack.c.b16 %v117, %v116
  %v144 = vpack.c.b16 %v119, %v118
  %v145 = vpack.c.b16 %v121, %v120
  %v146 = vpack.c.b16 %v123, %v122
  %v147 = vpack.c.b16 %v125, %v124
  %v148 = vpack.c.b16 %v127, %v126
  %v149 = vpack.c.b16 %v129, %v128
  %v150 = vpack.c.b16 %v131, %v130
  %v151 = vpack.c.b16 %v133, %v132
  %v152 = vpack.c.b16 %v135, %v134
  %v153 = vpack.c.b16 %v137, %v136
  %170 = vmatpush.bf16.msra.mxu0 %v145
  %171 = vmatpush.bf16.msra.mxu0 %v144
  %172 = vmatpush.bf16.msra.mxu0 %v143
  %173 = vmatpush.bf16.msra.mxu0 %v142
  %174 = vmatpush.bf16.msra.mxu0 %v141
  %175 = vmatpush.bf16.msra.mxu0 %v140
  %176 = vmatpush.bf16.msra.mxu0 %v139
  %177 = vmatpush.bf16.msra.mxu0 %v138
  %178 = vmatmul.bf16.gmra.mxu0 %v69
  %v179 = vpop.f32.mrf.mxu0
  %v180 = vadd.f32 %v72, %v179
  %v181 = vpop.f32.mrf.mxu0
  %182 = vdwg.mxu0
  %183 = vmatpush.bf16.msra.mxu0 %v153
  %184 = vmatpush.bf16.msra.mxu0 %v152
  %185 = vmatpush.bf16.msra.mxu0 %v151
  %186 = vmatpush.bf16.msra.mxu0 %v150
  %187 = vmatpush.bf16.msra.mxu0 %v149
  %188 = vmatpush.bf16.msra.mxu0 %v148
  %189 = vmatpush.bf16.msra.mxu0 %v147
  %190 = vmatpush.bf16.msra.mxu0 %v146
  %191 = vmatmul.bf16.gmra.mxu0 %v70
  %v192 = vpop.f32.mrf.mxu0
  %v193 = vadd.f32 %v180, %v192
  %v194 = vpop.f32.mrf.mxu0
  %195 = vdwg.mxu0
  %v196 = vmax.f32 %v193, 0.0
  %197 = vst [vmem:[#allocation2 + $0x8] sm:$0xff] %v196
  %v198 = vld [vmem:[%s0 + $0x8] sm:$0xff]
  %v199 = vld [vmem:[%s0 + $0x10] sm:$0xff]
  %v200 = vpack.c.bf16 %v198, %v198
  %v201 = vpack.c.bf16 %v199, %v199
  %202 = vmatpush.bf16.msra.mxu0 %v145
  %203 = vmatpush.bf16.msra.mxu0 %v144
  %204 = vmatpush.bf16.msra.mxu0 %v143
  %205 = vmatpush.bf16.msra.mxu0 %v142
  %206 = vmatpush.bf16.msra.mxu0 %v141
  %207 = vmatpush.bf16.msra.mxu0 %v140
  %208 = vmatpush.bf16.msra.mxu0 %v139
  %209 = vmatpush.bf16.msra.mxu0 %v138
  %210 = vmatmul.bf16.gmra.mxu0 %v200
  %v211 = vpop.f32.mrf.mxu0
  %v212 = vadd.f32 %v72, %v211
  %v213 = vpop.f32.mrf.mxu0
  %214 = vdwg.mxu0
  %215 = vmatpush.bf16.msra.mxu0 %v153
  %216 = vmatpush.bf16.msra.mxu0 %v152
  %217 = vmatpush.bf16.msra.mxu0 %v151
  %218 = vmatpush.bf16.msra.mxu0 %v150
  %219 = vmatpush.bf16.msra.mxu0 %v149
  %220 = vmatpush.bf16.msra.mxu0 %v148
  %221 = vmatpush.bf16.msra.mxu0 %v147
  %222 = vmatpush.bf16.msra.mxu0 %v146
  %223 = vmatmul.bf16.gmra.mxu0 %v201
  %v224 = vpop.f32.mrf.mxu0
  %v225 = vadd.f32 %v212, %v224
  %v226 = vpop.f32.mrf.mxu0
  %227 = vdwg.mxu0
  %v228 = vmax.f32 %v225, 0.0
  %229 = vst [vmem:[#allocation2 + $0x10] sm:$0xff] %v228
  %v230 = vld [vmem:[%s0 + $0x10] sm:$0xff]
  %v231 = vld [vmem:[%s0 + $0x18] sm:$0xff]
  %v232 = vpack.c.bf16 %v230, %v230
  %v233 = vpack.c.bf16 %v231, %v231
  %234 = vmatpush.bf16.msra.mxu0 %v145
  %235 = vmatpush.bf16.msra.mxu0 %v144
  %236 = vmatpush.bf16.msra.mxu0 %v143
  %237 = vmatpush.bf16.msra.mxu0 %v142
  %238 = vmatpush.bf16.msra.mxu0 %v141
  %239 = vmatpush.bf16.msra.mxu0 %v140
  %240 = vmatpush.bf16.msra.mxu0 %v139
  %241 = vmatpush.bf16.msra.mxu0 %v138
  %242 = vmatmul.bf16.gmra.mxu0 %v232
  %v243 = vpop.f32.mrf.mxu0
  %v244 = vadd.f32 %v72, %v243
  %v245 = vpop.f32.mrf.mxu0
  %246 = vdwg.mxu0
  %247 = vmatpush.bf16.msra.mxu0 %v153
  %248 = vmatpush.bf16.msra.mxu0 %v152
  %249 = vmatpush.bf16.msra.mxu0 %v151
  %250 = vmatpush.bf16.msra.mxu0 %v150
  %251 = vmatpush.bf16.msra.mxu0 %v149
  %252 = vmatpush.bf16.msra.mxu0 %v148
  %253 = vmatpush.bf16.msra.mxu0 %v147
  %254 = vmatpush.bf16.msra.mxu0 %v146
  %255 = vmatmul.bf16.gmra.mxu0 %v233
  %v256 = vpop.f32.mrf.mxu0
  %v257 = vadd.f32 %v244, %v256
  %v258 = vpop.f32.mrf.mxu0
  %259 = vdwg.mxu0
  %v260 = vmax.f32 %v257, 0.0
  %261 = vst [vmem:[#allocation2 + $0x18] sm:$0xff] %v260
  %v262 = vld [vmem:[%s0 + $0x18] sm:$0xff]
  %v263 = vld [vmem:[%s0 + $0x20] sm:$0xff]
  %v264 = vpack.c.bf16 %v262, %v262
  %v265 = vpack.c.bf16 %v263, %v263
  %266 = vmatpush.bf16.msra.mxu0 %v145
  %267 = vmatpush.bf16.msra.mxu0 %v144
  %268 = vmatpush.bf16.msra.mxu0 %v143
  %269 = vmatpush.bf16.msra.mxu0 %v142
  %270 = vmatpush.bf16.msra.mxu0 %v141
  %271 = vmatpush.bf16.msra.mxu0 %v140
  %272 = vmatpush.bf16.msra.mxu0 %v139
  %273 = vmatpush.bf16.msra.mxu0 %v138
  %274 = vmatmul.bf16.gmra.mxu0 %v264
  %v275 = vpop.f32.mrf.mxu0
  %v276 = vadd.f32 %v72, %v275
  %v277 = vpop.f32.mrf.mxu0
  %278 = vdwg.mxu0
  %279 = vmatpush.bf16.msra.mxu0 %v153
  %280 = vmatpush.bf16.msra.mxu0 %v152
  %281 = vmatpush.bf16.msra.mxu0 %v151
  %282 = vmatpush.bf16.msra.mxu0 %v150
  %283 = vmatpush.bf16.msra.mxu0 %v149
  %284 = vmatpush.bf16.msra.mxu0 %v148
  %285 = vmatpush.bf16.msra.mxu0 %v147
  %286 = vmatpush.bf16.msra.mxu0 %v146
  %287 = vmatmul.bf16.gmra.mxu0 %v265
  %v288 = vpop.f32.mrf.mxu0
  %v289 = vadd.f32 %v276, %v288
  %v290 = vpop.f32.mrf.mxu0
  %291 = vdwg.mxu0
  %v292 = vmax.f32 %v289, 0.0
  %293 = vst [vmem:[#allocation2 + $0x20] sm:$0xff] %v292
  %v294 = vld [vmem:[%s0 + $0x20] sm:$0xff]
  %v295 = vld [vmem:[%s0 + $0x28] sm:$0xff]
  %v296 = vpack.c.bf16 %v294, %v294
  %v297 = vpack.c.bf16 %v295, %v295
  %298 = vmatpush.bf16.msra.mxu0 %v145
  %299 = vmatpush.bf16.msra.mxu0 %v144
  %300 = vmatpush.bf16.msra.mxu0 %v143
  %301 = vmatpush.bf16.msra.mxu0 %v142
  %302 = vmatpush.bf16.msra.mxu0 %v141
  %303 = vmatpush.bf16.msra.mxu0 %v140
  %304 = vmatpush.bf16.msra.mxu0 %v139
  %305 = vmatpush.bf16.msra.mxu0 %v138
  %306 = vmatmul.bf16.gmra.mxu0 %v296
  %v307 = vpop.f32.mrf.mxu0
  %v308 = vadd.f32 %v72, %v307
  %v309 = vpop.f32.mrf.mxu0
  %310 = vdwg.mxu0
  %311 = vmatpush.bf16.msra.mxu0 %v153
  %312 = vmatpush.bf16.msra.mxu0 %v152
  %313 = vmatpush.bf16.msra.mxu0 %v151
  %314 = vmatpush.bf16.msra.mxu0 %v150
  %315 = vmatpush.bf16.msra.mxu0 %v149
  %316 = vmatpush.bf16.msra.mxu0 %v148
  %317 = vmatpush.bf16.msra.mxu0 %v147
  %318 = vmatpush.bf16.msra.mxu0 %v146
  %319 = vmatmul.bf16.gmra.mxu0 %v297
  %v320 = vpop.f32.mrf.mxu0
  %v321 = vadd.f32 %v308, %v320
  %v322 = vpop.f32.mrf.mxu0
  %323 = vdwg.mxu0
  %v324 = vmax.f32 %v321, 0.0
  %325 = vst [vmem:[#allocation2 + $0x28] sm:$0xff] %v324
  %v326 = vld [vmem:[%s0 + $0x28] sm:$0xff]
  %v327 = vld [vmem:[%s0 + $0x30] sm:$0xff]
  %v328 = vpack.c.bf16 %v326, %v326
  %v329 = vpack.c.bf16 %v327, %v327
  %330 = vmatpush.bf16.msra.mxu0 %v145
  %331 = vmatpush.bf16.msra.mxu0 %v144
  %332 = vmatpush.bf16.msra.mxu0 %v143
  %333 = vmatpush.bf16.msra.mxu0 %v142
  %334 = vmatpush.bf16.msra.mxu0 %v141
  %335 = vmatpush.bf16.msra.mxu0 %v140
  %336 = vmatpush.bf16.msra.mxu0 %v139
  %337 = vmatpush.bf16.msra.mxu0 %v138
  %338 = vmatmul.bf16.gmra.mxu0 %v328
  %v339 = vpop.f32.mrf.mxu0
  %v340 = vadd.f32 %v72, %v339
  %v341 = vpop.f32.mrf.mxu0
  %342 = vdwg.mxu0
  %343 = vmatpush.bf16.msra.mxu0 %v153
  %344 = vmatpush.bf16.msra.mxu0 %v152
  %345 = vmatpush.bf16.msra.mxu0 %v151
  %346 = vmatpush.bf16.msra.mxu0 %v150
  %347 = vmatpush.bf16.msra.mxu0 %v149
  %348 = vmatpush.bf16.msra.mxu0 %v148
  %349 = vmatpush.bf16.msra.mxu0 %v147
  %350 = vmatpush.bf16.msra.mxu0 %v146
  %351 = vmatmul.bf16.gmra.mxu0 %v329
  %v352 = vpop.f32.mrf.mxu0
  %v353 = vadd.f32 %v340, %v352
  %v354 = vpop.f32.mrf.mxu0
  %355 = vdwg.mxu0
  %v356 = vmax.f32 %v353, 0.0
  %357 = vst [vmem:[#allocation2 + $0x30] sm:$0xff] %v356
  %v358 = vld [vmem:[%s0 + $0x30] sm:$0xff]
  %v359 = vld [vmem:[%s0 + $0x38] sm:$0xff]
  %v360 = vpack.c.bf16 %v358, %v358
  %v361 = vpack.c.bf16 %v359, %v359
  %362 = vmatpush.bf16.msra.mxu0 %v145
  %363 = vmatpush.bf16.msra.mxu0 %v144
  %364 = vmatpush.bf16.msra.mxu0 %v143
  %365 = vmatpush.bf16.msra.mxu0 %v142
  %366 = vmatpush.bf16.msra.mxu0 %v141
  %367 = vmatpush.bf16.msra.mxu0 %v140
  %368 = vmatpush.bf16.msra.mxu0 %v139
  %369 = vmatpush.bf16.msra.mxu0 %v138
  %370 = vmatmul.bf16.gmra.mxu0 %v360
  %v371 = vpop.f32.mrf.mxu0
  %v372 = vadd.f32 %v72, %v371
  %v373 = vpop.f32.mrf.mxu0
  %374 = vdwg.mxu0
  %375 = vmatpush.bf16.msra.mxu0 %v153
  %376 = vmatpush.bf16.msra.mxu0 %v152
  %377 = vmatpush.bf16.msra.mxu0 %v151
  %378 = vmatpush.bf16.msra.mxu0 %v150
  %379 = vmatpush.bf16.msra.mxu0 %v149
  %380 = vmatpush.bf16.msra.mxu0 %v148
  %381 = vmatpush.bf16.msra.mxu0 %v147
  %382 = vmatpush.bf16.msra.mxu0 %v146
  %383 = vmatmul.bf16.gmra.mxu0 %v361
  %v384 = vpop.f32.mrf.mxu0
  %v385 = vadd.f32 %v372, %v384
  %v386 = vpop.f32.mrf.mxu0
  %387 = vdwg.mxu0
  %v388 = vmax.f32 %v385, 0.0
  %389 = vst [vmem:[#allocation2 + $0x38] sm:$0xff] %v388
  %v390 = vld [vmem:[%s0 + $0x38] sm:$0xff]
  %v391 = vld [vmem:[%s0 + $0x40] sm:$0xff]
  %v392 = vpack.c.bf16 %v390, %v390
  %v393 = vpack.c.bf16 %v391, %v391
  %394 = vmatpush.bf16.msra.mxu0 %v145
  %395 = vmatpush.bf16.msra.mxu0 %v144
  %396 = vmatpush.bf16.msra.mxu0 %v143
  %397 = vmatpush.bf16.msra.mxu0 %v142
  %398 = vmatpush.bf16.msra.mxu0 %v141
  %399 = vmatpush.bf16.msra.mxu0 %v140
  %400 = vmatpush.bf16.msra.mxu0 %v139
  %401 = vmatpush.bf16.msra.mxu0 %v138
  %402 = vmatmul.bf16.gmra.mxu0 %v392
  %v403 = vpop.f32.mrf.mxu0
  %v404 = vadd.f32 %v72, %v403
  %v405 = vpop.f32.mrf.mxu0
  %406 = vdwg.mxu0
  %407 = vmatpush.bf16.msra.mxu0 %v153
  %408 = vmatpush.bf16.msra.mxu0 %v152
  %409 = vmatpush.bf16.msra.mxu0 %v151
  %410 = vmatpush.bf16.msra.mxu0 %v150
  %411 = vmatpush.bf16.msra.mxu0 %v149
  %412 = vmatpush.bf16.msra.mxu0 %v148
  %413 = vmatpush.bf16.msra.mxu0 %v147
  %414 = vmatpush.bf16.msra.mxu0 %v146
  %415 = vmatmul.bf16.gmra.mxu0 %v393
  %v416 = vpop.f32.mrf.mxu0
  %v417 = vadd.f32 %v404, %v416
  %v418 = vpop.f32.mrf.mxu0
  %419 = vdwg.mxu0
  %v420 = vmax.f32 %v417, 0.0
  %421 = vst [vmem:[#allocation2 + $0x40] sm:$0xff] %v420
  %v422 = vld [vmem:[%s3] sm:$0xf]
  %v423 = vld [vmem:[%s3 + $0x4] sm:$0xf]
  %v424 = vld [vmem:[%s3 + $0x8] sm:$0xf]
  %v425 = vld [vmem:[%s3 + $0xc] sm:$0xf]
  %v426 = vld [vmem:[%s3 + $0x10] sm:$0xf]
  %v427 = vld [vmem:[%s3 + $0x14] sm:$0xf]
  %v428 = vld [vmem:[%s3 + $0x18] sm:$0xf]
  %v429 = vld [vmem:[%s3 + $0x1c] sm:$0xf]
  %v430 = vld [vmem:[%s3 + $0x20] sm:$0xf]
  %v431 = vld [vmem:[%s3 + $0x24] sm:$0xf]
  %v432 = vld [vmem:[%s3 + $0x28] sm:$0xf]
  %v433 = vld [vmem:[%s3 + $0x2c] sm:$0xf]
  %v434 = vld [vmem:[%s3 + $0x30] sm:$0xf]
  %v435 = vld [vmem:[%s3 + $0x34] sm:$0xf]
  %v436 = vld [vmem:[%s3 + $0x38] sm:$0xf]
  %v437 = vld [vmem:[%s3 + $0x3c] sm:$0xf]
  %v438 = vld [vmem:[%s3 + $0x40] sm:$0xf]
  %v439 = vld [vmem:[%s3 + $0x44] sm:$0xf]
  %v440 = vld [vmem:[%s3 + $0x48] sm:$0xf]
  %v441 = vld [vmem:[%s3 + $0x4c] sm:$0xf]
  %v442 = vld [vmem:[%s3 + $0x50] sm:$0xf]
  %v443 = vld [vmem:[%s3 + $0x54] sm:$0xf]
  %v444 = vld [vmem:[%s3 + $0x58] sm:$0xf]
  %v445 = vld [vmem:[%s3 + $0x5c] sm:$0xf]
  %v446 = vld [vmem:[%s3 + $0x60] sm:$0xf]
  %v447 = vld [vmem:[%s3 + $0x64] sm:$0xf]
  %v448 = vld [vmem:[%s3 + $0x68] sm:$0xf]
  %v449 = vld [vmem:[%s3 + $0x6c] sm:$0xf]
  %v450 = vld [vmem:[%s3 + $0x70] sm:$0xf]
  %v451 = vld [vmem:[%s3 + $0x74] sm:$0xf]
  %v452 = vld [vmem:[%s3 + $0x78] sm:$0xf]
  %v453 = vld [vmem:[%s3 + $0x7c] sm:$0xf]
  %v454 = vld [vmem:[%s3 + $0x80] sm:$0xf]
  %v455 = vld [vmem:[%s3 + $0x84] sm:$0xf]
  %v456 = vld [vmem:[%s3 + $0x88] sm:$0xf]
  %v457 = vld [vmem:[%s3 + $0x8c] sm:$0xf]
  %v458 = vld [vmem:[%s3 + $0x90] sm:$0xf]
  %v459 = vld [vmem:[%s3 + $0x94] sm:$0xf]
  %v460 = vld [vmem:[%s3 + $0x98] sm:$0xf]
  %v461 = vld [vmem:[%s3 + $0x9c] sm:$0xf]
  %v462 = vld [vmem:[%s3 + $0xa0] sm:$0xf]
  %v463 = vld [vmem:[%s3 + $0xa4] sm:$0xf]
  %v464 = vld [vmem:[%s3 + $0xa8] sm:$0xf]
  %v465 = vld [vmem:[%s3 + $0xac] sm:$0xf]
  %v466 = vld [vmem:[%s3 + $0xb0] sm:$0xf]
  %v467 = vld [vmem:[%s3 + $0xb4] sm:$0xf]
  %v468 = vld [vmem:[%s3 + $0xb8] sm:$0xf]
  %v469 = vld [vmem:[%s3 + $0xbc] sm:$0xf]
  %v470 = vld [vmem:[%s3 + $0xc0] sm:$0xf]
  %v471 = vld [vmem:[%s3 + $0xc4] sm:$0xf]
  %v472 = vld [vmem:[%s3 + $0xc8] sm:$0xf]
  %v473 = vld [vmem:[%s3 + $0xcc] sm:$0xf]
  %v474 = vld [vmem:[%s3 + $0xd0] sm:$0xf]
  %v475 = vld [vmem:[%s3 + $0xd4] sm:$0xf]
  %v476 = vld [vmem:[%s3 + $0xd8] sm:$0xf]
  %v477 = vld [vmem:[%s3 + $0xdc] sm:$0xf]
  %v478 = vld [vmem:[%s3 + $0xe0] sm:$0xf]
  %v479 = vld [vmem:[%s3 + $0xe4] sm:$0xf]
  %v480 = vld [vmem:[%s3 + $0xe8] sm:$0xf]
  %v481 = vld [vmem:[%s3 + $0xec] sm:$0xf]
  %v482 = vld [vmem:[%s3 + $0xf0] sm:$0xf]
  %v483 = vld [vmem:[%s3 + $0xf4] sm:$0xf]
  %v484 = vld [vmem:[%s3 + $0xf8] sm:$0xf]
  %v485 = vld [vmem:[%s3 + $0xfc] sm:$0xf]
  %v486 = vld [vmem:[%s4] sm:$0x1]
  %v487 = vld [vmem:[#allocation2] sm:$0xff]
  %v488 = vld [vmem:[#allocation2 + $0x8] sm:$0xff]
  %v489 = vld [vmem:[#allocation2 + $0x10] sm:$0xff]
  %v490 = vld [vmem:[#allocation2 + $0x18] sm:$0xff]
  %v491 = vpack.c.bf16 %v487, %v487
  %v492 = vpack.c.bf16 %v488, %v488
  %v493 = vpack.c.bf16 %v489, %v489
  %v494 = vpack.c.bf16 %v490, %v490
  %v496 = vperm.slane %v486, 0
  %v562 = vunpack.c.l.b16 %v422
  %v563 = vunpack.c.l.b16 %v423
  %v564 = vunpack.c.l.b16 %v424
  %v565 = vunpack.c.l.b16 %v425
  %v566 = vunpack.c.l.b16 %v426
  %v567 = vunpack.c.l.b16 %v427
  %v568 = vunpack.c.l.b16 %v428
  %v569 = vunpack.c.l.b16 %v429
  %v570 = vunpack.c.l.b16 %v430
  %v571 = vunpack.c.l.b16 %v431
  %v572 = vunpack.c.l.b16 %v432
  %v573 = vunpack.c.l.b16 %v433
  %v574 = vunpack.c.l.b16 %v434
  %v575 = vunpack.c.l.b16 %v435
  %v576 = vunpack.c.l.b16 %v436
  %v577 = vunpack.c.l.b16 %v437
  %v578 = vunpack.c.l.b16 %v438
  %v579 = vunpack.c.l.b16 %v439
  %v580 = vunpack.c.l.b16 %v440
  %v581 = vunpack.c.l.b16 %v441
  %v582 = vunpack.c.l.b16 %v442
  %v583 = vunpack.c.l.b16 %v443
  %v584 = vunpack.c.l.b16 %v444
  %v585 = vunpack.c.l.b16 %v445
  %v586 = vunpack.c.l.b16 %v446
  %v587 = vunpack.c.l.b16 %v447
  %v588 = vunpack.c.l.b16 %v448
  %v589 = vunpack.c.l.b16 %v449
  %v590 = vunpack.c.l.b16 %v450
  %v591 = vunpack.c.l.b16 %v451
  %v592 = vunpack.c.l.b16 %v452
  %v593 = vunpack.c.l.b16 %v453
  %v594 = vunpack.c.l.b16 %v454
  %v595 = vunpack.c.l.b16 %v455
  %v596 = vunpack.c.l.b16 %v456
  %v597 = vunpack.c.l.b16 %v457
  %v598 = vunpack.c.l.b16 %v458
  %v599 = vunpack.c.l.b16 %v459
  %v600 = vunpack.c.l.b16 %v460
  %v601 = vunpack.c.l.b16 %v461
  %v602 = vunpack.c.l.b16 %v462
  %v603 = vunpack.c.l.b16 %v463
  %v604 = vunpack.c.l.b16 %v464
  %v605 = vunpack.c.l.b16 %v465
  %v606 = vunpack.c.l.b16 %v466
  %v607 = vunpack.c.l.b16 %v467
  %v608 = vunpack.c.l.b16 %v468
  %v609 = vunpack.c.l.b16 %v469
  %v610 = vunpack.c.l.b16 %v470
  %v611 = vunpack.c.l.b16 %v471
  %v612 = vunpack.c.l.b16 %v472
  %v613 = vunpack.c.l.b16 %v473
  %v614 = vunpack.c.l.b16 %v474
  %v615 = vunpack.c.l.b16 %v475
  %v616 = vunpack.c.l.b16 %v476
  %v617 = vunpack.c.l.b16 %v477
  %v618 = vunpack.c.l.b16 %v478
  %v619 = vunpack.c.l.b16 %v479
  %v620 = vunpack.c.l.b16 %v480
  %v621 = vunpack.c.l.b16 %v481
  %v622 = vunpack.c.l.b16 %v482
  %v623 = vunpack.c.l.b16 %v483
  %v624 = vunpack.c.l.b16 %v484
  %v625 = vunpack.c.l.b16 %v485
  %v626 = vpack.c.b16 %v563, %v562
  %v627 = vpack.c.b16 %v565, %v564
  %v628 = vpack.c.b16 %v567, %v566
  %v629 = vpack.c.b16 %v569, %v568
  %v630 = vpack.c.b16 %v571, %v570
  %v631 = vpack.c.b16 %v573, %v572
  %v632 = vpack.c.b16 %v575, %v574
  %v633 = vpack.c.b16 %v577, %v576
  %v634 = vpack.c.b16 %v579, %v578
  %v635 = vpack.c.b16 %v581, %v580
  %v636 = vpack.c.b16 %v583, %v582
  %v637 = vpack.c.b16 %v585, %v584
  %v638 = vpack.c.b16 %v587, %v586
  %v639 = vpack.c.b16 %v589, %v588
  %v640 = vpack.c.b16 %v591, %v590
  %v641 = vpack.c.b16 %v593, %v592
  %v642 = vpack.c.b16 %v595, %v594
  %v643 = vpack.c.b16 %v597, %v596
  %v644 = vpack.c.b16 %v599, %v598
  %v645 = vpack.c.b16 %v601, %v600
  %v646 = vpack.c.b16 %v603, %v602
  %v647 = vpack.c.b16 %v605, %v604
  %v648 = vpack.c.b16 %v607, %v606
  %v649 = vpack.c.b16 %v609, %v608
  %v650 = vpack.c.b16 %v611, %v610
  %v651 = vpack.c.b16 %v613, %v612
  %v652 = vpack.c.b16 %v615, %v614
  %v653 = vpack.c.b16 %v617, %v616
  %v654 = vpack.c.b16 %v619, %v618
  %v655 = vpack.c.b16 %v621, %v620
  %v656 = vpack.c.b16 %v623, %v622
  %v657 = vpack.c.b16 %v625, %v624
  %690 = vmatpush.bf16.msra.mxu0 %v633
  %691 = vmatpush.bf16.msra.mxu0 %v632
  %692 = vmatpush.bf16.msra.mxu0 %v631
  %693 = vmatpush.bf16.msra.mxu0 %v630
  %694 = vmatpush.bf16.msra.mxu0 %v629
  %695 = vmatpush.bf16.msra.mxu0 %v628
  %696 = vmatpush.bf16.msra.mxu0 %v627
  %697 = vmatpush.bf16.msra.mxu0 %v626
  %698 = vmatmul.bf16.gmra.mxu0 %v491
  %v699 = vpop.f32.mrf.mxu0
  %v700 = vadd.f32 %v496, %v699
  %v701 = vpop.f32.mrf.mxu0
  %702 = vdwg.mxu0
  %703 = vmatpush.bf16.msra.mxu0 %v641
  %704 = vmatpush.bf16.msra.mxu0 %v640
  %705 = vmatpush.bf16.msra.mxu0 %v639
  %706 = vmatpush.bf16.msra.mxu0 %v638
  %707 = vmatpush.bf16.msra.mxu0 %v637
  %708 = vmatpush.bf16.msra.mxu0 %v636
  %709 = vmatpush.bf16.msra.mxu0 %v635
  %710 = vmatpush.bf16.msra.mxu0 %v634
  %711 = vmatmul.bf16.gmra.mxu0 %v492
  %v712 = vpop.f32.mrf.mxu0
  %v713 = vadd.f32 %v700, %v712
  %v714 = vpop.f32.mrf.mxu0
  %715 = vdwg.mxu0
  %716 = vmatpush.bf16.msra.mxu0 %v649
  %717 = vmatpush.bf16.msra.mxu0 %v648
  %718 = vmatpush.bf16.msra.mxu0 %v647
  %719 = vmatpush.bf16.msra.mxu0 %v646
  %720 = vmatpush.bf16.msra.mxu0 %v645
  %721 = vmatpush.bf16.msra.mxu0 %v644
  %722 = vmatpush.bf16.msra.mxu0 %v643
  %723 = vmatpush.bf16.msra.mxu0 %v642
  %724 = vmatmul.bf16.gmra.mxu0 %v493
  %v725 = vpop.f32.mrf.mxu0
  %v726 = vadd.f32 %v713, %v725
  %v727 = vpop.f32.mrf.mxu0
  %728 = vdwg.mxu0
  %729 = vmatpush.bf16.msra.mxu0 %v657
  %730 = vmatpush.bf16.msra.mxu0 %v656
  %731 = vmatpush.bf16.msra.mxu0 %v655
  %732 = vmatpush.bf16.msra.mxu0 %v654
  %733 = vmatpush.bf16.msra.mxu0 %v653
  %734 = vmatpush.bf16.msra.mxu0 %v652
  %735 = vmatpush.bf16.msra.mxu0 %v651
  %736 = vmatpush.bf16.msra.mxu0 %v650
  %737 = vmatmul.bf16.gmra.mxu0 %v494
  %v738 = vpop.f32.mrf.mxu0
  %v739 = vadd.f32 %v726, %v738
  %v740 = vpop.f32.mrf.mxu0
  %741 = vdwg.mxu0
  %v742 = vmax.f32 %v739, 0.0
  %743 = vst [vmem:[#allocation3] sm:$0xff] %v742
  %v744 = vld [vmem:[#allocation2 + $0x10] sm:$0xff]
  %v745 = vld [vmem:[#allocation2 + $0x18] sm:$0xff]
  %v746 = vld [vmem:[#allocation2 + $0x20] sm:$0xff]
  %v747 = vld [vmem:[#allocation2 + $0x28] sm:$0xff]
  %v748 = vpack.c.bf16 %v744, %v744
  %v749 = vpack.c.bf16 %v745, %v745
  %v750 = vpack.c.bf16 %v746, %v746
  %v751 = vpack.c.bf16 %v747, %v747
  %752 = vmatpush.bf16.msra.mxu0 %v633
  %753 = vmatpush.bf16.msra.mxu0 %v632
  %754 = vmatpush.bf16.msra.mxu0 %v631
  %755 = vmatpush.bf16.msra.mxu0 %v630
  %756 = vmatpush.bf16.msra.mxu0 %v629
  %757 = vmatpush.bf16.msra.mxu0 %v628
  %758 = vmatpush.bf16.msra.mxu0 %v627
  %759 = vmatpush.bf16.msra.mxu0 %v626
  %760 = vmatmul.bf16.gmra.mxu0 %v748
  %v761 = vpop.f32.mrf.mxu0
  %v762 = vadd.f32 %v496, %v761
  %v763 = vpop.f32.mrf.mxu0
  %764 = vdwg.mxu0
  %765 = vmatpush.bf16.msra.mxu0 %v641
  %766 = vmatpush.bf16.msra.mxu0 %v640
  %767 = vmatpush.bf16.msra.mxu0 %v639
  %768 = vmatpush.bf16.msra.mxu0 %v638
  %769 = vmatpush.bf16.msra.mxu0 %v637
  %770 = vmatpush.bf16.msra.mxu0 %v636
  %771 = vmatpush.bf16.msra.mxu0 %v635
  %772 = vmatpush.bf16.msra.mxu0 %v634
  %773 = vmatmul.bf16.gmra.mxu0 %v749
  %v774 = vpop.f32.mrf.mxu0
  %v775 = vadd.f32 %v762, %v774
  %v776 = vpop.f32.mrf.mxu0
  %777 = vdwg.mxu0
  %778 = vmatpush.bf16.msra.mxu0 %v649
  %779 = vmatpush.bf16.msra.mxu0 %v648
  %780 = vmatpush.bf16.msra.mxu0 %v647
  %781 = vmatpush.bf16.msra.mxu0 %v646
  %782 = vmatpush.bf16.msra.mxu0 %v645
  %783 = vmatpush.bf16.msra.mxu0 %v644
  %784 = vmatpush.bf16.msra.mxu0 %v643
  %785 = vmatpush.bf16.msra.mxu0 %v642
  %786 = vmatmul.bf16.gmra.mxu0 %v750
  %v787 = vpop.f32.mrf.mxu0
  %v788 = vadd.f32 %v775, %v787
  %v789 = vpop.f32.mrf.mxu0
  %790 = vdwg.mxu0
  %791 = vmatpush.bf16.msra.mxu0 %v657
  %792 = vmatpush.bf16.msra.mxu0 %v656
  %793 = vmatpush.bf16.msra.mxu0 %v655
  %794 = vmatpush.bf16.msra.mxu0 %v654
  %795 = vmatpush.bf16.msra.mxu0 %v653
  %796 = vmatpush.bf16.msra.mxu0 %v652
  %797 = vmatpush.bf16.msra.mxu0 %v651
  %798 = vmatpush.bf16.msra.mxu0 %v650
  %799 = vmatmul.bf16.gmra.mxu0 %v751
  %v800 = vpop.f32.mrf.mxu0
  %v801 = vadd.f32 %v788, %v800
  %v802 = vpop.f32.mrf.mxu0
  %803 = vdwg.mxu0
  %v804 = vmax.f32 %v801, 0.0
  %805 = vst [vmem:[#allocation3 + $0x8] sm:$0xff] %v804
  %v806 = vld [vmem:[#allocation2 + $0x20] sm:$0xff]
  %v807 = vld [vmem:[#allocation2 + $0x28] sm:$0xff]
  %v808 = vld [vmem:[#allocation2 + $0x30] sm:$0xff]
  %v809 = vld [vmem:[#allocation2 + $0x38] sm:$0xff]
  %v810 = vpack.c.bf16 %v806, %v806
  %v811 = vpack.c.bf16 %v807, %v807
  %v812 = vpack.c.bf16 %v808, %v808
  %v813 = vpack.c.bf16 %v809, %v809
  %814 = vmatpush.bf16.msra.mxu0 %v633
  %815 = vmatpush.bf16.msra.mxu0 %v632
  %816 = vmatpush.bf16.msra.mxu0 %v631
  %817 = vmatpush.bf16.msra.mxu0 %v630
  %818 = vmatpush.bf16.msra.mxu0 %v629
  %819 = vmatpush.bf16.msra.mxu0 %v628
  %820 = vmatpush.bf16.msra.mxu0 %v627
  %821 = vmatpush.bf16.msra.mxu0 %v626
  %822 = vmatmul.bf16.gmra.mxu0 %v810
  %v823 = vpop.f32.mrf.mxu0
  %v824 = vadd.f32 %v496, %v823
  %v825 = vpop.f32.mrf.mxu0
  %826 = vdwg.mxu0
  %827 = vmatpush.bf16.msra.mxu0 %v641
  %828 = vmatpush.bf16.msra.mxu0 %v640
  %829 = vmatpush.bf16.msra.mxu0 %v639
  %830 = vmatpush.bf16.msra.mxu0 %v638
  %831 = vmatpush.bf16.msra.mxu0 %v637
  %832 = vmatpush.bf16.msra.mxu0 %v636
  %833 = vmatpush.bf16.msra.mxu0 %v635
  %834 = vmatpush.bf16.msra.mxu0 %v634
  %835 = vmatmul.bf16.gmra.mxu0 %v811
  %v836 = vpop.f32.mrf.mxu0
  %v837 = vadd.f32 %v824, %v836
  %v838 = vpop.f32.mrf.mxu0
  %839 = vdwg.mxu0
  %840 = vmatpush.bf16.msra.mxu0 %v649
  %841 = vmatpush.bf16.msra.mxu0 %v648
  %842 = vmatpush.bf16.msra.mxu0 %v647
  %843 = vmatpush.bf16.msra.mxu0 %v646
  %844 = vmatpush.bf16.msra.mxu0 %v645
  %845 = vmatpush.bf16.msra.mxu0 %v644
  %846 = vmatpush.bf16.msra.mxu0 %v643
  %847 = vmatpush.bf16.msra.mxu0 %v642
  %848 = vmatmul.bf16.gmra.mxu0 %v812
  %v849 = vpop.f32.mrf.mxu0
  %v850 = vadd.f32 %v837, %v849
  %v851 = vpop.f32.mrf.mxu0
  %852 = vdwg.mxu0
  %853 = vmatpush.bf16.msra.mxu0 %v657
  %854 = vmatpush.bf16.msra.mxu0 %v656
  %855 = vmatpush.bf16.msra.mxu0 %v655
  %856 = vmatpush.bf16.msra.mxu0 %v654
  %857 = vmatpush.bf16.msra.mxu0 %v653
  %858 = vmatpush.bf16.msra.mxu0 %v652
  %859 = vmatpush.bf16.msra.mxu0 %v651
  %860 = vmatpush.bf16.msra.mxu0 %v650
  %861 = vmatmul.bf16.gmra.mxu0 %v813
  %v862 = vpop.f32.mrf.mxu0
  %v863 = vadd.f32 %v850, %v862
  %v864 = vpop.f32.mrf.mxu0
  %865 = vdwg.mxu0
  %v866 = vmax.f32 %v863, 0.0
  %867 = vst [vmem:[#allocation3 + $0x10] sm:$0xff] %v866
  %v868 = vld [vmem:[#allocation2 + $0x30] sm:$0xff]
  %v869 = vld [vmem:[#allocation2 + $0x38] sm:$0xff]
  %v870 = vld [vmem:[#allocation2 + $0x40] sm:$0xff]
  %v871 = vld [vmem:[#allocation2 + $0x48] sm:$0xff]
  %v872 = vpack.c.bf16 %v868, %v868
  %v873 = vpack.c.bf16 %v869, %v869
  %v874 = vpack.c.bf16 %v870, %v870
  %v875 = vpack.c.bf16 %v871, %v871
  %876 = vmatpush.bf16.msra.mxu0 %v633
  %877 = vmatpush.bf16.msra.mxu0 %v632
  %878 = vmatpush.bf16.msra.mxu0 %v631
  %879 = vmatpush.bf16.msra.mxu0 %v630
  %880 = vmatpush.bf16.msra.mxu0 %v629
  %881 = vmatpush.bf16.msra.mxu0 %v628
  %882 = vmatpush.bf16.msra.mxu0 %v627
  %883 = vmatpush.bf16.msra.mxu0 %v626
  %884 = vmatmul.bf16.gmra.mxu0 %v872
  %v885 = vpop.f32.mrf.mxu0
  %v886 = vadd.f32 %v496, %v885
  %v887 = vpop.f32.mrf.mxu0
  %888 = vdwg.mxu0
  %889 = vmatpush.bf16.msra.mxu0 %v641
  %890 = vmatpush.bf16.msra.mxu0 %v640
  %891 = vmatpush.bf16.msra.mxu0 %v639
  %892 = vmatpush.bf16.msra.mxu0 %v638
  %893 = vmatpush.bf16.msra.mxu0 %v637
  %894 = vmatpush.bf16.msra.mxu0 %v636
  %895 = vmatpush.bf16.msra.mxu0 %v635
  %896 = vmatpush.bf16.msra.mxu0 %v634
  %897 = vmatmul.bf16.gmra.mxu0 %v873
  %v898 = vpop.f32.mrf.mxu0
  %v899 = vadd.f32 %v886, %v898
  %v900 = vpop.f32.mrf.mxu0
  %901 = vdwg.mxu0
  %902 = vmatpush.bf16.msra.mxu0 %v649
  %903 = vmatpush.bf16.msra.mxu0 %v648
  %904 = vmatpush.bf16.msra.mxu0 %v647
  %905 = vmatpush.bf16.msra.mxu0 %v646
  %906 = vmatpush.bf16.msra.mxu0 %v645
  %907 = vmatpush.bf16.msra.mxu0 %v644
  %908 = vmatpush.bf16.msra.mxu0 %v643
  %909 = vmatpush.bf16.msra.mxu0 %v642
  %910 = vmatmul.bf16.gmra.mxu0 %v874
  %v911 = vpop.f32.mrf.mxu0
  %v912 = vadd.f32 %v899, %v911
  %v913 = vpop.f32.mrf.mxu0
  %914 = vdwg.mxu0
  %915 = vmatpush.bf16.msra.mxu0 %v657
  %916 = vmatpush.bf16.msra.mxu0 %v656
  %917 = vmatpush.bf16.msra.mxu0 %v655
  %918 = vmatpush.bf16.msra.mxu0 %v654
  %919 = vmatpush.bf16.msra.mxu0 %v653
  %920 = vmatpush.bf16.msra.mxu0 %v652
  %921 = vmatpush.bf16.msra.mxu0 %v651
  %922 = vmatpush.bf16.msra.mxu0 %v650
  %923 = vmatmul.bf16.gmra.mxu0 %v875
  %v924 = vpop.f32.mrf.mxu0
  %v925 = vadd.f32 %v912, %v924
  %v926 = vpop.f32.mrf.mxu0
  %927 = vdwg.mxu0
  %v928 = vmax.f32 %v925, 0.0
  %929 = vst [vmem:[#allocation3 + $0x18] sm:$0xff] %v928
  %v930 = vld [vmem:[#allocation3] sm:$0xff]
  %v931 = vld [vmem:[#allocation3 + $0x8] sm:$0xff]
  %v932 = vld [vmem:[#allocation3 + $0x10] sm:$0xff]
  %v933 = vld [vmem:[#allocation3 + $0x18] sm:$0xff]
  %v934 = vpack.c.bf16 %v930, %v930
  %v935 = vpack.c.bf16 %v931, %v931
  %v936 = vpack.c.bf16 %v932, %v932
  %v937 = vpack.c.bf16 %v933, %v933
  %v938 = vld [vmem:[%s5] sm:$0xf]
  %v939 = vld [vmem:[%s5 + $0x4] sm:$0xf]
  %v940 = vld [vmem:[%s5 + $0x8] sm:$0xf]
  %v941 = vld [vmem:[%s5 + $0xc] sm:$0xf]
  %v942 = vld [vmem:[%s5 + $0x10] sm:$0xf]
  %v943 = vld [vmem:[%s5 + $0x14] sm:$0xf]
  %v944 = vld [vmem:[%s5 + $0x18] sm:$0xf]
  %v945 = vld [vmem:[%s5 + $0x1c] sm:$0xf]
  %v946 = vld [vmem:[%s5 + $0x20] sm:$0xf]
  %v947 = vld [vmem:[%s5 + $0x24] sm:$0xf]
  %v948 = vld [vmem:[%s5 + $0x28] sm:$0xf]
  %v949 = vld [vmem:[%s5 + $0x2c] sm:$0xf]
  %v950 = vld [vmem:[%s5 + $0x30] sm:$0xf]
  %v951 = vld [vmem:[%s5 + $0x34] sm:$0xf]
  %v952 = vld [vmem:[%s5 + $0x38] sm:$0xf]
  %v953 = vld [vmem:[%s5 + $0x3c] sm:$0xf]
  %v954 = vld [vmem:[%s5 + $0x40] sm:$0xf]
  %v955 = vld [vmem:[%s5 + $0x44] sm:$0xf]
  %v956 = vld [vmem:[%s5 + $0x48] sm:$0xf]
  %v957 = vld [vmem:[%s5 + $0x4c] sm:$0xf]
  %v958 = vld [vmem:[%s5 + $0x50] sm:$0xf]
  %v959 = vld [vmem:[%s5 + $0x54] sm:$0xf]
  %v960 = vld [vmem:[%s5 + $0x58] sm:$0xf]
  %v961 = vld [vmem:[%s5 + $0x5c] sm:$0xf]
  %v962 = vld [vmem:[%s5 + $0x60] sm:$0xf]
  %v963 = vld [vmem:[%s5 + $0x64] sm:$0xf]
  %v964 = vld [vmem:[%s5 + $0x68] sm:$0xf]
  %v965 = vld [vmem:[%s5 + $0x6c] sm:$0xf]
  %v966 = vld [vmem:[%s5 + $0x70] sm:$0xf]
  %v967 = vld [vmem:[%s5 + $0x74] sm:$0xf]
  %v968 = vld [vmem:[%s5 + $0x78] sm:$0xf]
  %v969 = vld [vmem:[%s5 + $0x7c] sm:$0xf]
  %v970 = vld [vmem:[%s5 + $0x80] sm:$0xf]
  %v971 = vld [vmem:[%s5 + $0x84] sm:$0xf]
  %v972 = vld [vmem:[%s5 + $0x88] sm:$0xf]
  %v973 = vld [vmem:[%s5 + $0x8c] sm:$0xf]
  %v974 = vld [vmem:[%s5 + $0x90] sm:$0xf]
  %v975 = vld [vmem:[%s5 + $0x94] sm:$0xf]
  %v976 = vld [vmem:[%s5 + $0x98] sm:$0xf]
  %v977 = vld [vmem:[%s5 + $0x9c] sm:$0xf]
  %v978 = vld [vmem:[%s5 + $0xa0] sm:$0xf]
  %v979 = vld [vmem:[%s5 + $0xa4] sm:$0xf]
  %v980 = vld [vmem:[%s5 + $0xa8] sm:$0xf]
  %v981 = vld [vmem:[%s5 + $0xac] sm:$0xf]
  %v982 = vld [vmem:[%s5 + $0xb0] sm:$0xf]
  %v983 = vld [vmem:[%s5 + $0xb4] sm:$0xf]
  %v984 = vld [vmem:[%s5 + $0xb8] sm:$0xf]
  %v985 = vld [vmem:[%s5 + $0xbc] sm:$0xf]
  %v986 = vld [vmem:[%s5 + $0xc0] sm:$0xf]
  %v987 = vld [vmem:[%s5 + $0xc4] sm:$0xf]
  %v988 = vld [vmem:[%s5 + $0xc8] sm:$0xf]
  %v989 = vld [vmem:[%s5 + $0xcc] sm:$0xf]
  %v990 = vld [vmem:[%s5 + $0xd0] sm:$0xf]
  %v991 = vld [vmem:[%s5 + $0xd4] sm:$0xf]
  %v992 = vld [vmem:[%s5 + $0xd8] sm:$0xf]
  %v993 = vld [vmem:[%s5 + $0xdc] sm:$0xf]
  %v994 = vld [vmem:[%s5 + $0xe0] sm:$0xf]
  %v995 = vld [vmem:[%s5 + $0xe4] sm:$0xf]
  %v996 = vld [vmem:[%s5 + $0xe8] sm:$0xf]
  %v997 = vld [vmem:[%s5 + $0xec] sm:$0xf]
  %v998 = vld [vmem:[%s5 + $0xf0] sm:$0xf]
  %v999 = vld [vmem:[%s5 + $0xf4] sm:$0xf]
  %v1000 = vld [vmem:[%s5 + $0xf8] sm:$0xf]
  %v1001 = vld [vmem:[%s5 + $0xfc] sm:$0xf]
  %v1002 = vld [vmem:[%s6] sm:$0x1]
  %v1004 = vperm.slane %v1002, 0
  %v1070 = vunpack.c.l.b16 %v938
  %v1071 = vunpack.c.l.b16 %v939
  %v1072 = vunpack.c.l.b16 %v940
  %v1073 = vunpack.c.l.b16 %v941
  %v1074 = vunpack.c.l.b16 %v942
  %v1075 = vunpack.c.l.b16 %v943
  %v1076 = vunpack.c.l.b16 %v944
  %v1077 = vunpack.c.l.b16 %v945
  %v1078 = vunpack.c.l.b16 %v946
  %v1079 = vunpack.c.l.b16 %v947
  %v1080 = vunpack.c.l.b16 %v948
  %v1081 = vunpack.c.l.b16 %v949
  %v1082 = vunpack.c.l.b16 %v950
  %v1083 = vunpack.c.l.b16 %v951
  %v1084 = vunpack.c.l.b16 %v952
  %v1085 = vunpack.c.l.b16 %v953
  %v1086 = vunpack.c.l.b16 %v954
  %v1087 = vunpack.c.l.b16 %v955
  %v1088 = vunpack.c.l.b16 %v956
  %v1089 = vunpack.c.l.b16 %v957
  %v1090 = vunpack.c.l.b16 %v958
  %v1091 = vunpack.c.l.b16 %v959
  %v1092 = vunpack.c.l.b16 %v960
  %v1093 = vunpack.c.l.b16 %v961
  %v1094 = vunpack.c.l.b16 %v962
  %v1095 = vunpack.c.l.b16 %v963
  %v1096 = vunpack.c.l.b16 %v964
  %v1097 = vunpack.c.l.b16 %v965
  %v1098 = vunpack.c.l.b16 %v966
  %v1099 = vunpack.c.l.b16 %v967
  %v1100 = vunpack.c.l.b16 %v968
  %v1101 = vunpack.c.l.b16 %v969
  %v1102 = vunpack.c.l.b16 %v970
  %v1103 = vunpack.c.l.b16 %v971
  %v1104 = vunpack.c.l.b16 %v972
  %v1105 = vunpack.c.l.b16 %v973
  %v1106 = vunpack.c.l.b16 %v974
  %v1107 = vunpack.c.l.b16 %v975
  %v1108 = vunpack.c.l.b16 %v976
  %v1109 = vunpack.c.l.b16 %v977
  %v1110 = vunpack.c.l.b16 %v978
  %v1111 = vunpack.c.l.b16 %v979
  %v1112 = vunpack.c.l.b16 %v980
  %v1113 = vunpack.c.l.b16 %v981
  %v1114 = vunpack.c.l.b16 %v982
  %v1115 = vunpack.c.l.b16 %v983
  %v1116 = vunpack.c.l.b16 %v984
  %v1117 = vunpack.c.l.b16 %v985
  %v1118 = vunpack.c.l.b16 %v986
  %v1119 = vunpack.c.l.b16 %v987
  %v1120 = vunpack.c.l.b16 %v988
  %v1121 = vunpack.c.l.b16 %v989
  %v1122 = vunpack.c.l.b16 %v990
  %v1123 = vunpack.c.l.b16 %v991
  %v1124 = vunpack.c.l.b16 %v992
  %v1125 = vunpack.c.l.b16 %v993
  %v1126 = vunpack.c.l.b16 %v994
  %v1127 = vunpack.c.l.b16 %v995
  %v1128 = vunpack.c.l.b16 %v996
  %v1129 = vunpack.c.l.b16 %v997
  %v1130 = vunpack.c.l.b16 %v998
  %v1131 = vunpack.c.l.b16 %v999
  %v1132 = vunpack.c.l.b16 %v1000
  %v1133 = vunpack.c.l.b16 %v1001
  %v1134 = vpack.c.b16 %v1071, %v1070
  %v1135 = vpack.c.b16 %v1073, %v1072
  %v1136 = vpack.c.b16 %v1075, %v1074
  %v1137 = vpack.c.b16 %v1077, %v1076
  %v1138 = vpack.c.b16 %v1079, %v1078
  %v1139 = vpack.c.b16 %v1081, %v1080
  %v1140 = vpack.c.b16 %v1083, %v1082
  %v1141 = vpack.c.b16 %v1085, %v1084
  %v1142 = vpack.c.b16 %v1087, %v1086
  %v1143 = vpack.c.b16 %v1089, %v1088
  %v1144 = vpack.c.b16 %v1091, %v1090
  %v1145 = vpack.c.b16 %v1093, %v1092
  %v1146 = vpack.c.b16 %v1095, %v1094
  %v1147 = vpack.c.b16 %v1097, %v1096
  %v1148 = vpack.c.b16 %v1099, %v1098
  %v1149 = vpack.c.b16 %v1101, %v1100
  %v1150 = vpack.c.b16 %v1103, %v1102
  %v1151 = vpack.c.b16 %v1105, %v1104
  %v1152 = vpack.c.b16 %v1107, %v1106
  %v1153 = vpack.c.b16 %v1109, %v1108
  %v1154 = vpack.c.b16 %v1111, %v1110
  %v1155 = vpack.c.b16 %v1113, %v1112
  %v1156 = vpack.c.b16 %v1115, %v1114
  %v1157 = vpack.c.b16 %v1117, %v1116
  %v1158 = vpack.c.b16 %v1119, %v1118
  %v1159 = vpack.c.b16 %v1121, %v1120
  %v1160 = vpack.c.b16 %v1123, %v1122
  %v1161 = vpack.c.b16 %v1125, %v1124
  %v1162 = vpack.c.b16 %v1127, %v1126
  %v1163 = vpack.c.b16 %v1129, %v1128
  %v1164 = vpack.c.b16 %v1131, %v1130
  %v1165 = vpack.c.b16 %v1133, %v1132
  %1198 = vmatpush.bf16.msra.mxu0 %v1141
  %1199 = vmatpush.bf16.msra.mxu0 %v1140
  %1200 = vmatpush.bf16.msra.mxu0 %v1139
  %1201 = vmatpush.bf16.msra.mxu0 %v1138
  %1202 = vmatpush.bf16.msra.mxu0 %v1137
  %1203 = vmatpush.bf16.msra.mxu0 %v1136
  %1204 = vmatpush.bf16.msra.mxu0 %v1135
  %1205 = vmatpush.bf16.msra.mxu0 %v1134
  %1206 = vmatmul.bf16.gmra.mxu0 %v934
  %v1207 = vpop.f32.mrf.mxu0
  %v1208 = vadd.f32 %v1004, %v1207
  %v1209 = vpop.f32.mrf.mxu0
  %1210 = vdwg.mxu0
  %1211 = vmatpush.bf16.msra.mxu0 %v1149
  %1212 = vmatpush.bf16.msra.mxu0 %v1148
  %1213 = vmatpush.bf16.msra.mxu0 %v1147
  %1214 = vmatpush.bf16.msra.mxu0 %v1146
  %1215 = vmatpush.bf16.msra.mxu0 %v1145
  %1216 = vmatpush.bf16.msra.mxu0 %v1144
  %1217 = vmatpush.bf16.msra.mxu0 %v1143
  %1218 = vmatpush.bf16.msra.mxu0 %v1142
  %1219 = vmatmul.bf16.gmra.mxu0 %v935
  %v1220 = vpop.f32.mrf.mxu0
  %v1221 = vadd.f32 %v1208, %v1220
  %v1222 = vpop.f32.mrf.mxu0
  %1223 = vdwg.mxu0
  %1224 = vmatpush.bf16.msra.mxu0 %v1157
  %1225 = vmatpush.bf16.msra.mxu0 %v1156
  %1226 = vmatpush.bf16.msra.mxu0 %v1155
  %1227 = vmatpush.bf16.msra.mxu0 %v1154
  %1228 = vmatpush.bf16.msra.mxu0 %v1153
  %1229 = vmatpush.bf16.msra.mxu0 %v1152
  %1230 = vmatpush.bf16.msra.mxu0 %v1151
  %1231 = vmatpush.bf16.msra.mxu0 %v1150
  %1232 = vmatmul.bf16.gmra.mxu0 %v936
  %v1233 = vpop.f32.mrf.mxu0
  %v1234 = vadd.f32 %v1221, %v1233
  %v1235 = vpop.f32.mrf.mxu0
  %1236 = vdwg.mxu0
  %1237 = vmatpush.bf16.msra.mxu0 %v1165
  %1238 = vmatpush.bf16.msra.mxu0 %v1164
  %1239 = vmatpush.bf16.msra.mxu0 %v1163
  %1240 = vmatpush.bf16.msra.mxu0 %v1162
  %1241 = vmatpush.bf16.msra.mxu0 %v1161
  %1242 = vmatpush.bf16.msra.mxu0 %v1160
  %1243 = vmatpush.bf16.msra.mxu0 %v1159
  %1244 = vmatpush.bf16.msra.mxu0 %v1158
  %1245 = vmatmul.bf16.gmra.mxu0 %v937
  %v1246 = vpop.f32.mrf.mxu0
  %v1247 = vadd.f32 %v1234, %v1246
  %v1248 = vpop.f32.mrf.mxu0
  %1249 = vdwg.mxu0
  %v1250 = vmax.f32 %v1247, 0.0
  %v1251 = vpack.c.bf16 %v1250, %v1250
  %v1252 = vld [vmem:[%s7] sm:$0xf]
  %v1253 = vld [vmem:[%s7 + $0x4] sm:$0xf]
  %v1254 = vld [vmem:[%s7 + $0x8] sm:$0xf]
  %v1255 = vld [vmem:[%s7 + $0xc] sm:$0xf]
  %v1256 = vld [vmem:[%s7 + $0x10] sm:$0xf]
  %v1257 = vld [vmem:[%s7 + $0x14] sm:$0xf]
  %v1258 = vld [vmem:[%s7 + $0x18] sm:$0xf]
  %v1259 = vld [vmem:[%s7 + $0x1c] sm:$0xf]
  %v1260 = vld [vmem:[%s7 + $0x20] sm:$0xf]
  %v1261 = vld [vmem:[%s7 + $0x24] sm:$0xf]
  %v1262 = vld [vmem:[%s7 + $0x28] sm:$0xf]
  %v1263 = vld [vmem:[%s7 + $0x2c] sm:$0xf]
  %v1264 = vld [vmem:[%s7 + $0x30] sm:$0xf]
  %v1265 = vld [vmem:[%s7 + $0x34] sm:$0xf]
  %v1266 = vld [vmem:[%s7 + $0x38] sm:$0xf]
  %v1267 = vld [vmem:[%s7 + $0x3c] sm:$0xf]
  %v1268 = vld [vmem:[%s8] sm:$0x1]
  %v1270 = vperm.slane %v1268, 0
  %v1288 = vunpack.c.l.b16 %v1252
  %v1289 = vunpack.c.l.b16 %v1253
  %v1290 = vunpack.c.l.b16 %v1254
  %v1291 = vunpack.c.l.b16 %v1255
  %v1292 = vunpack.c.l.b16 %v1256
  %v1293 = vunpack.c.l.b16 %v1257
  %v1294 = vunpack.c.l.b16 %v1258
  %v1295 = vunpack.c.l.b16 %v1259
  %v1296 = vunpack.c.l.b16 %v1260
  %v1297 = vunpack.c.l.b16 %v1261
  %v1298 = vunpack.c.l.b16 %v1262
  %v1299 = vunpack.c.l.b16 %v1263
  %v1300 = vunpack.c.l.b16 %v1264
  %v1301 = vunpack.c.l.b16 %v1265
  %v1302 = vunpack.c.l.b16 %v1266
  %v1303 = vunpack.c.l.b16 %v1267
  %v1304 = vpack.c.b16 %v1289, %v1288
  %v1305 = vpack.c.b16 %v1291, %v1290
  %v1306 = vpack.c.b16 %v1293, %v1292
  %v1307 = vpack.c.b16 %v1295, %v1294
  %v1308 = vpack.c.b16 %v1297, %v1296
  %v1309 = vpack.c.b16 %v1299, %v1298
  %v1310 = vpack.c.b16 %v1301, %v1300
  %v1311 = vpack.c.b16 %v1303, %v1302
  %1320 = vmatpush.bf16.msra.mxu0 %v1311
  %1321 = vmatpush.bf16.msra.mxu0 %v1310
  %1322 = vmatpush.bf16.msra.mxu0 %v1309
  %1323 = vmatpush.bf16.msra.mxu0 %v1308
  %1324 = vmatpush.bf16.msra.mxu0 %v1307
  %1325 = vmatpush.bf16.msra.mxu0 %v1306
  %1326 = vmatpush.bf16.msra.mxu0 %v1305
  %1327 = vmatpush.bf16.msra.mxu0 %v1304
  %1328 = vmatmul.bf16.gmra.mxu0 %v1251
  %v1329 = vpop.f32.mrf.mxu0
  %v1330 = vadd.f32 %v1270, %v1329
  %v1331 = vpop.f32.mrf.mxu0
  %1332 = vdwg.mxu0
  %1333 = vst [vmem:[%s9] sm:$0xff] %v1330
  // Predicated region
  $region38: #{fused_forward.1} parent=0 // pred_check
    _
  $region39: #{fused_forward.1} parent=0 // pred_check_branch
    %1335 = sbr.rel (0) target = $region41
  $region40: #{fused_forward.1} parent=0 // pred_region
    _
  $region41: #{fused_forward.1} parent=0 // pred_fallthru
    _
  // Predicated region
  $region42: #{fused_forward.1} parent=0 // pred_check
    _
  $region43: #{fused_forward.1} parent=0 // pred_check_branch
    %1337 = sbr.rel (0) target = $region45
  $region44: #{fused_forward.1} parent=0 // pred_region
    _
  $region45: #{fused_forward.1} parent=0 // pred_fallthru
    _

</llo_original>
